<compile_context>
chip_gen: v6e
topology: v6e:2x2x1
jax: 0.10.0
libtpu: 0.0.40
codegen_flags: <defaults>
</compile_context>

<pallas_src>
import functools

import jax
import jax.numpy as jnp
from jax import lax
from jax.experimental import pallas as pl
from jax.experimental.pallas import tpu as pltpu

IN_DIM = 768      # BERT pooler width
HID = 128         # branch hidden size
OUT_PAD = 128     # per-branch output lanes padded to a full vreg lane group (aligned slices)
BN_EPS = 1e-5
NEG = -1e30       # logit value for padded classes -> exp underflows to exactly 0


def _wisdom_kernel(x_ref, w1_ref, b1_ref, w2_ref, b2_ref, soft_ref, idx_ref,
                   *, num_classes):
    """Single fused invocation: all branches' dense1 (BN folded), dense2, softmax, argmax.

    x_ref    : (B, IN_DIM)         f32  pooler output (shared by all branches)
    w1_ref   : (IN_DIM, C*HID)     f32  BN-folded dense1 weights, all branches concatenated
    b1_ref   : (1, C*HID)          f32  BN-folded dense1 bias
    w2_ref   : (C*HID, C*OUT_PAD)  f32  block-diagonal dense2 weights (zero off-diagonal / pad)
    b2_ref   : (1, C*OUT_PAD)      f32  dense2 bias, padded classes = NEG
    soft_ref : (B, C*OUT_PAD)      f32  per-branch softmax in aligned 128-lane blocks
    idx_ref  : (B, OUT_PAD)        i32  per-branch argmax in columns [0, C)
    """
    x = x_ref[...]                                                   # (B, IN_DIM)

    # dense1 for every branch in one MXU pass (BatchNorm already folded into W1'/b1').
    h = jnp.dot(x, w1_ref[...], preferred_element_type=jnp.float32) + b1_ref[...]   # (B, C*HID)

    # dropout (p=0.1) in eval mode == identity

    # dense2 for every branch in one MXU pass (block-diagonal weights).
    logits = jnp.dot(h, w2_ref[...], preferred_element_type=jnp.float32) + b2_ref[...]  # (B, C*P)

    B = x.shape[0]
    # lane index within a 128-lane branch block; also reused to place branch c's argmax
    # into column c of the index slab. Hoisted out of the loop (broadcasts are not CSE'd).
    lane = lax.broadcasted_iota(jnp.int32, (B, OUT_PAD), 1)
    idx_slab = jnp.zeros((B, OUT_PAD), jnp.int32)

    for c in range(num_classes):                                     # tiny static unroll
        lc = logits[:, c * OUT_PAD:(c + 1) * OUT_PAD]                # (B, 128), lane-aligned
        m = jnp.max(lc, axis=-1, keepdims=True)                      # (B, 1)
        # Padded classes sit at ~NEG, so exp(lc - m) underflows to exactly 0 for them.
        e = jnp.exp(lc - m)
        s = e * pl.reciprocal(jnp.sum(e, axis=-1, keepdims=True), approx=True)
        soft_ref[:, c * OUT_PAD:(c + 1) * OUT_PAD] = s               # aligned, unmasked store

        # argmax straight from the logits (softmax is strictly monotone per row),
        # first-max-wins like torch.argmax; padded classes (NEG) can never win.
        idx = jnp.min(jnp.where(lc >= m, lane, jnp.int32(OUT_PAD)),
                      axis=-1, keepdims=True)                        # (B, 1) i32
        idx_slab = jnp.where(lane == c, idx, idx_slab)               # put in column c

    idx_ref[...] = idx_slab                                          # one (B, 128) i32 store


def wisdom_branches_forward(pooler_out, packed, out_dims):
    """Everything downstream of pooler_output for all branches, in one pallas_call."""
    B = pooler_out.shape[0]
    C = len(out_dims)

    soft_pad, idx_pad = pl.pallas_call(
        functools.partial(_wisdom_kernel, num_classes=C),
        out_shape=(
            jax.ShapeDtypeStruct((B, C * OUT_PAD), jnp.float32),
            jax.ShapeDtypeStruct((B, OUT_PAD), jnp.int32),
        ),
        in_specs=[pl.BlockSpec(memory_space=pltpu.MemorySpace.VMEM) for _ in range(5)],
        out_specs=(pl.BlockSpec(memory_space=pltpu.MemorySpace.VMEM),
                   pl.BlockSpec(memory_space=pltpu.MemorySpace.VMEM)),
        # No grid: the whole problem (< 2 MiB of operands) is VMEM-resident in one invocation,
        # removing per-branch grid-step overhead and per-branch weight DMAs.
        # TODO(synk): for large batches, add a "parallel" batch-tile grid axis and re-check the
        #             VMEM budget against v7x's 64 MiB.
    )(pooler_out, packed["w1"], packed["b1"], packed["w2"], packed["b2"])

    # slice the lane-padded slabs back to the ragged per-branch widths
    out_soft = [soft_pad[:, c * OUT_PAD:c * OUT_PAD + out_dims[c]] for c in range(C)]
    indices = idx_pad[:, :C]                                         # (B, C), like torch.stack(dim=1)
    return out_soft, indices


# ----------------------------------------------------------------------------
# Plain-JAX glue: parameter init / offline packing and the BERT stand-in.
# ----------------------------------------------------------------------------

def init_raw_params(key, num_classes):
    """Per-branch PyTorch-style parameters (Linear default init, BatchNorm defaults)."""
    out_dims = [3 if i == 1 else 2 for i in range(num_classes)]
    keys = jax.random.split(key, 4 * num_classes)
    lim1 = 1.0 / (IN_DIM ** 0.5)
    lim2 = 1.0 / (HID ** 0.5)
    raw = []
    for c in range(num_classes):
        k1, k2, k3, k4 = keys[4 * c:4 * c + 4]
        raw.append(dict(
            w1=jax.random.uniform(k1, (IN_DIM, HID), jnp.float32, -lim1, lim1),
            b1=jax.random.uniform(k2, (HID,), jnp.float32, -lim1, lim1),
            gamma=jnp.ones((HID,), jnp.float32),
            beta=jnp.zeros((HID,), jnp.float32),
            mean=jnp.zeros((HID,), jnp.float32),
            var=jnp.ones((HID,), jnp.float32),
            w2=jax.random.uniform(k3, (HID, out_dims[c]), jnp.float32, -lim2, lim2),
            b2=jax.random.uniform(k4, (out_dims[c],), jnp.float32, -lim2, lim2),
        ))
    return raw, out_dims


def pack_params(raw, out_dims):
    """One-time parameter prep: fold inference BatchNorm into dense1 and fuse all branches
    into one wide dense1 plus one block-diagonal, lane-padded dense2."""
    C = len(raw)
    w1_cols, b1_cols = [], []
    w2_all = jnp.zeros((C * HID, C * OUT_PAD), jnp.float32)
    b2_all = jnp.full((1, C * OUT_PAD), NEG, jnp.float32)
    for c, p in enumerate(raw):
        scale = p["gamma"] * lax.rsqrt(p["var"] + BN_EPS)                 # (HID,)
        w1_cols.append(p["w1"] * scale[None, :])                          # (768, HID)
        b1_cols.append((p["b1"] - p["mean"]) * scale + p["beta"])         # (HID,)
        r0, c0 = c * HID, c * OUT_PAD
        w2_all = w2_all.at[r0:r0 + HID, c0:c0 + out_dims[c]].set(p["w2"])
        b2_all = b2_all.at[0, c0:c0 + out_dims[c]].set(p["b2"])
    return dict(
        w1=jnp.concatenate(w1_cols, axis=1),            # (768, C*128)
        b1=jnp.concatenate(b1_cols)[None, :],           # (1, C*128)
        w2=w2_all,                                      # (C*128, C*128)
        b2=b2_all,                                      # (1, C*128)
    )


def fake_bert_pooler(key, input_ids, attention_mask):
    """Deterministic stand-in for self.bert(...).pooler_output (plain JAX glue)."""
    vocab = 100
    ke, kp = jax.random.split(key)
    emb_table = jax.random.normal(ke, (vocab, IN_DIM), jnp.float32) * 0.02
    pooler_w = jax.random.normal(kp, (IN_DIM, IN_DIM), jnp.float32) * 0.02
    emb = emb_table[input_ids]                                  # (B, S, 768)
    mask = attention_mask[..., None].astype(jnp.float32)        # (B, S, 1)
    pooled = jnp.sum(emb * mask, axis=1) / jnp.maximum(jnp.sum(mask, axis=1), 1.0)
    return jnp.tanh(pooled @ pooler_w)                          # (B, 768)


def wisdom_net_forward(input_ids, attention_mask, packed, out_dims, bert_key):
    pooler_out = fake_bert_pooler(bert_key, input_ids, attention_mask)
    out_soft, indices = wisdom_branches_forward(pooler_out, packed, out_dims)
    # Match torch return: list of per-branch (B, out_c) softmax tensors, and (B, C) indices.
    return out_soft, indices


def reference_branches(pooler_out, raw, out_dims):
    """Pure-JAX reference of the WisdomNet head (per-branch, un-fused) for validation."""
    outs, idxs = [], []
    for p in raw:
        h = pooler_out @ p["w1"] + p["b1"]
        h = (h - p["mean"]) * lax.rsqrt(p["var"] + BN_EPS) * p["gamma"] + p["beta"]
        logits = h @ p["w2"] + p["b2"]
        s = jax.nn.softmax(logits, axis=-1)
        outs.append(s)
        idxs.append(jnp.argmax(s, axis=1).astype(jnp.int32))
    return outs, jnp.stack(idxs, axis=1)


if __name__ == "__main__":
    B, S, NUM_CLASSES = 8, 8, 3
    key = jax.random.PRNGKey(0)
    k_ids, k_params, k_bert = jax.random.split(key, 3)

    input_ids = jax.random.randint(k_ids, (B, S), 0, 100, dtype=jnp.int32)
    attention_mask = jnp.ones((B, S), jnp.int32)

    raw_params, out_dims = init_raw_params(k_params, NUM_CLASSES)
    packed = pack_params(raw_params, out_dims)

    out_soft_list, indices = wisdom_net_forward(
        input_ids, attention_mask, packed, out_dims, k_bert)
    for o in out_soft_list:
        jax.block_until_ready(o)
    indices = jax.block_until_ready(indices)

    # structural checks
    assert len(out_soft_list) == NUM_CLASSES
    assert out_soft_list[0].shape == (B, 2)
    assert out_soft_list[1].shape == (B, 3)          # branch 1 has 3 outputs
    assert indices.shape == (B, NUM_CLASSES)
    # softmax rows sum to ~1 (approx reciprocal -> loose tolerance)
    for o in out_soft_list:
        assert jnp.allclose(jnp.sum(o, axis=-1), 1.0, atol=1e-2)

    # numerical check against a plain-JAX per-branch reference of the same forward pass
    pooler_out = fake_bert_pooler(k_bert, input_ids, attention_mask)
    ref_soft, ref_idx = reference_branches(pooler_out, raw_params, out_dims)
    for o, r in zip(out_soft_list, ref_soft):
        assert jnp.allclose(o, r, atol=1e-2, rtol=1e-2)
    assert jnp.array_equal(indices, ref_idx)

    print("KERNEL_OK")
</pallas_src>

<mosaic_0001>
module attributes {stable_mosaic.version = 11 : i64} {
  func.func @_wisdom_kernel(%arg0: memref<8x768xf32, #tpu.memory_space<vmem>>, %arg1: memref<768x384xf32, #tpu.memory_space<vmem>>, %arg2: memref<1x384xf32, #tpu.memory_space<vmem>>, %arg3: memref<384x384xf32, #tpu.memory_space<vmem>>, %arg4: memref<1x384xf32, #tpu.memory_space<vmem>>, %arg5: memref<8x384xf32, #tpu.memory_space<vmem>>, %arg6: memref<8x128xi32, #tpu.memory_space<vmem>>) attributes {dimension_semantics = [], scalar_prefetch = 0 : i64, scratch_operands = 0 : i64, tpu.core_type = #tpu.core_type<tc>} {
    %c0 = arith.constant 0 : index
    %c0_0 = arith.constant 0 : index
    %0 = vector.load %arg0[%c0, %c0_0] : memref<8x768xf32, #tpu.memory_space<vmem>>, vector<8x768xf32>
    %c0_1 = arith.constant 0 : index
    %c0_2 = arith.constant 0 : index
    %1 = vector.load %arg1[%c0_1, %c0_2] : memref<768x384xf32, #tpu.memory_space<vmem>>, vector<768x384xf32>
    %cst = arith.constant dense<0.000000e+00> : vector<8x384xf32>
    %2 = tpu.matmul %0, %1, %cst {dimension_numbers = #tpu.dot_dimension_numbers<[1], [0], [0], [1], [0, 0, 1, 1], [], []>} : vector<8x768xf32>, vector<768x384xf32>, vector<8x384xf32> -> vector<8x384xf32>
    %c0_3 = arith.constant 0 : index
    %c0_4 = arith.constant 0 : index
    %3 = vector.load %arg2[%c0_3, %c0_4] : memref<1x384xf32, #tpu.memory_space<vmem>>, vector<1x384xf32>
    %4 = vector.broadcast %3 : vector<1x384xf32> to vector<8x384xf32>
    %5 = arith.addf %2, %4 : vector<8x384xf32>
    %c0_5 = arith.constant 0 : index
    %c0_6 = arith.constant 0 : index
    %6 = vector.load %arg3[%c0_5, %c0_6] : memref<384x384xf32, #tpu.memory_space<vmem>>, vector<384x384xf32>
    %cst_7 = arith.constant dense<0.000000e+00> : vector<8x384xf32>
    %7 = tpu.matmul %5, %6, %cst_7 {dimension_numbers = #tpu.dot_dimension_numbers<[1], [0], [0], [1], [0, 0, 1, 1], [], []>} : vector<8x384xf32>, vector<384x384xf32>, vector<8x384xf32> -> vector<8x384xf32>
    %c0_8 = arith.constant 0 : index
    %c0_9 = arith.constant 0 : index
    %8 = vector.load %arg4[%c0_8, %c0_9] : memref<1x384xf32, #tpu.memory_space<vmem>>, vector<1x384xf32>
    %9 = vector.broadcast %8 : vector<1x384xf32> to vector<8x384xf32>
    %10 = arith.addf %7, %9 : vector<8x384xf32>
    %11 = tpu.iota {dimensions = array<i32: 1>} : vector<8x128xi32>
    %c0_i32 = arith.constant 0 : i32
    %12 = vector.broadcast %c0_i32 : i32 to vector<8x128xi32>
    %13 = vector.extract_strided_slice %10 {offsets = [0, 0], sizes = [8, 128], strides = [1, 1]} : vector<8x384xf32> to vector<8x128xf32>
    %cst_10 = arith.constant dense<0xFF800000> : vector<8xf32>
    %14 = vector.multi_reduction <maximumf>, %13, %cst_10 [1] : vector<8x128xf32> to vector<8xf32>
    %15 = vector.shape_cast %14 : vector<8xf32> to vector<8x1xf32>
    %16 = vector.broadcast %15 : vector<8x1xf32> to vector<8x128xf32>
    %17 = arith.subf %13, %16 : vector<8x128xf32>
    %18 = math.exp %17 : vector<8x128xf32>
    %cst_11 = arith.constant dense<0.000000e+00> : vector<8xf32>
    %19 = vector.multi_reduction <add>, %18, %cst_11 [1] : vector<8x128xf32> to vector<8xf32>
    %20 = vector.shape_cast %19 : vector<8xf32> to vector<8x1xf32>
    %21 = tpu.reciprocal %20 {approx = true} : vector<8x1xf32> -> vector<8x1xf32>
    %22 = vector.broadcast %21 : vector<8x1xf32> to vector<8x128xf32>
    %23 = arith.mulf %18, %22 : vector<8x128xf32>
    %c0_12 = arith.constant 0 : index
    %c0_13 = arith.constant 0 : index
    %24 = vector.load %arg5[%c0_12, %c0_13] : memref<8x384xf32, #tpu.memory_space<vmem>>, vector<8x128xf32>
    tpu.vector_store %arg5[%c0_12, %c0_13], %23 {strides = array<i32>} : memref<8x384xf32, #tpu.memory_space<vmem>>, vector<8x128xf32>,
    %25 = vector.broadcast %15 : vector<8x1xf32> to vector<8x128xf32>
    %26 = arith.cmpf oge, %13, %25 : vector<8x128xf32>
    %c128_i32 = arith.constant 128 : i32
    %27 = vector.broadcast %c128_i32 : i32 to vector<8x128xi32>
    %28 = arith.select %26, %11, %27 : vector<8x128xi1>, vector<8x128xi32>
    %cst_14 = arith.constant dense<2147483647> : vector<8xi32>
    %29 = vector.multi_reduction <minsi>, %28, %cst_14 [1] : vector<8x128xi32> to vector<8xi32>
    %30 = vector.shape_cast %29 : vector<8xi32> to vector<8x1xi32>
    %c0_i32_15 = arith.constant 0 : i32
    %31 = vector.broadcast %c0_i32_15 : i32 to vector<8x128xi32>
    %32 = arith.cmpi eq, %11, %31 : vector<8x128xi32>
    %33 = vector.shape_cast %30 : vector<8x1xi32> to vector<8x1xi32>
    %34 = vector.broadcast %33 : vector<8x1xi32> to vector<8x128xi32>
    %35 = arith.select %32, %34, %12 : vector<8x128xi1>, vector<8x128xi32>
    %36 = vector.extract_strided_slice %10 {offsets = [0, 128], sizes = [8, 128], strides = [1, 1]} : vector<8x384xf32> to vector<8x128xf32>
    %cst_16 = arith.constant dense<0xFF800000> : vector<8xf32>
    %37 = vector.multi_reduction <maximumf>, %36, %cst_16 [1] : vector<8x128xf32> to vector<8xf32>
    %38 = vector.shape_cast %37 : vector<8xf32> to vector<8x1xf32>
    %39 = vector.broadcast %38 : vector<8x1xf32> to vector<8x128xf32>
    %40 = arith.subf %36, %39 : vector<8x128xf32>
    %41 = math.exp %40 : vector<8x128xf32>
    %cst_17 = arith.constant dense<0.000000e+00> : vector<8xf32>
    %42 = vector.multi_reduction <add>, %41, %cst_17 [1] : vector<8x128xf32> to vector<8xf32>
    %43 = vector.shape_cast %42 : vector<8xf32> to vector<8x1xf32>
    %44 = tpu.reciprocal %43 {approx = true} : vector<8x1xf32> -> vector<8x1xf32>
    %45 = vector.broadcast %44 : vector<8x1xf32> to vector<8x128xf32>
    %46 = arith.mulf %41, %45 : vector<8x128xf32>
    %c0_18 = arith.constant 0 : index
    %c128 = arith.constant 128 : index
    %47 = vector.load %arg5[%c0_18, %c128] : memref<8x384xf32, #tpu.memory_space<vmem>>, vector<8x128xf32>
    tpu.vector_store %arg5[%c0_18, %c128], %46 {strides = array<i32>} : memref<8x384xf32, #tpu.memory_space<vmem>>, vector<8x128xf32>,
    %48 = vector.broadcast %38 : vector<8x1xf32> to vector<8x128xf32>
    %49 = arith.cmpf oge, %36, %48 : vector<8x128xf32>
    %c128_i32_19 = arith.constant 128 : i32
    %50 = vector.broadcast %c128_i32_19 : i32 to vector<8x128xi32>
    %51 = arith.select %49, %11, %50 : vector<8x128xi1>, vector<8x128xi32>
    %cst_20 = arith.constant dense<2147483647> : vector<8xi32>
    %52 = vector.multi_reduction <minsi>, %51, %cst_20 [1] : vector<8x128xi32> to vector<8xi32>
    %53 = vector.shape_cast %52 : vector<8xi32> to vector<8x1xi32>
    %c1_i32 = arith.constant 1 : i32
    %54 = vector.broadcast %c1_i32 : i32 to vector<8x128xi32>
    %55 = arith.cmpi eq, %11, %54 : vector<8x128xi32>
    %56 = vector.shape_cast %53 : vector<8x1xi32> to vector<8x1xi32>
    %57 = vector.broadcast %56 : vector<8x1xi32> to vector<8x128xi32>
    %58 = arith.select %55, %57, %35 : vector<8x128xi1>, vector<8x128xi32>
    %59 = vector.extract_strided_slice %10 {offsets = [0, 256], sizes = [8, 128], strides = [1, 1]} : vector<8x384xf32> to vector<8x128xf32>
    %cst_21 = arith.constant dense<0xFF800000> : vector<8xf32>
    %60 = vector.multi_reduction <maximumf>, %59, %cst_21 [1] : vector<8x128xf32> to vector<8xf32>
    %61 = vector.shape_cast %60 : vector<8xf32> to vector<8x1xf32>
    %62 = vector.broadcast %61 : vector<8x1xf32> to vector<8x128xf32>
    %63 = arith.subf %59, %62 : vector<8x128xf32>
    %64 = math.exp %63 : vector<8x128xf32>
    %cst_22 = arith.constant dense<0.000000e+00> : vector<8xf32>
    %65 = vector.multi_reduction <add>, %64, %cst_22 [1] : vector<8x128xf32> to vector<8xf32>
    %66 = vector.shape_cast %65 : vector<8xf32> to vector<8x1xf32>
    %67 = tpu.reciprocal %66 {approx = true} : vector<8x1xf32> -> vector<8x1xf32>
    %68 = vector.broadcast %67 : vector<8x1xf32> to vector<8x128xf32>
    %69 = arith.mulf %64, %68 : vector<8x128xf32>
    %c0_23 = arith.constant 0 : index
    %c256 = arith.constant 256 : index
    %70 = vector.load %arg5[%c0_23, %c256] : memref<8x384xf32, #tpu.memory_space<vmem>>, vector<8x128xf32>
    tpu.vector_store %arg5[%c0_23, %c256], %69 {strides = array<i32>} : memref<8x384xf32, #tpu.memory_space<vmem>>, vector<8x128xf32>,
    %71 = vector.broadcast %61 : vector<8x1xf32> to vector<8x128xf32>
    %72 = arith.cmpf oge, %59, %71 : vector<8x128xf32>
    %c128_i32_24 = arith.constant 128 : i32
    %73 = vector.broadcast %c128_i32_24 : i32 to vector<8x128xi32>
    %74 = arith.select %72, %11, %73 : vector<8x128xi1>, vector<8x128xi32>
    %cst_25 = arith.constant dense<2147483647> : vector<8xi32>
    %75 = vector.multi_reduction <minsi>, %74, %cst_25 [1] : vector<8x128xi32> to vector<8xi32>
    %76 = vector.shape_cast %75 : vector<8xi32> to vector<8x1xi32>
    %c2_i32 = arith.constant 2 : i32
    %77 = vector.broadcast %c2_i32 : i32 to vector<8x128xi32>
    %78 = arith.cmpi eq, %11, %77 : vector<8x128xi32>
    %79 = vector.shape_cast %76 : vector<8x1xi32> to vector<8x1xi32>
    %80 = vector.broadcast %79 : vector<8x1xi32> to vector<8x128xi32>
    %81 = arith.select %78, %80, %58 : vector<8x128xi1>, vector<8x128xi32>
    %c0_26 = arith.constant 0 : index
    %c0_27 = arith.constant 0 : index
    %82 = vector.load %arg6[%c0_26, %c0_27] : memref<8x128xi32, #tpu.memory_space<vmem>>, vector<8x128xi32>
    tpu.vector_store %arg6[%c0_26, %c0_27], %81 {strides = array<i32>} : memref<8x128xi32, #tpu.memory_space<vmem>>, vector<8x128xi32>,
    return
  }
}

</mosaic_0001>

<llo_original>
// kernel: tpu_custom_call.1
$region0: #{tpu_custom_call.1}
  #allocation0 [shape = 'u32[]', space=smem, size = 0x4, offset = 0x4, fixed_abs, tag = 'smem constant byte address 0x4 - core index']
  #allocation1 [shape = 'u32[144,128]{1,0:T(1,128)}', space=vmem, size = 0x12000, scoped, tag = 'internal scratch']
  %s0 = inlined_call_operand.hbm [shape: f32[8,768], index: 0, kind: input, shape index: {}]
  %s1 = inlined_call_operand.hbm [shape: f32[768,384], index: 1, kind: input, shape index: {}]
  %s2 = inlined_call_operand.hbm [shape: f32[1,384], index: 2, kind: input, shape index: {}]
  %s3 = inlined_call_operand.hbm [shape: f32[384,384], index: 3, kind: input, shape index: {}]
  %s4 = inlined_call_operand.hbm [shape: f32[1,384], index: 4, kind: input, shape index: {}]
  %s5 = inlined_call_operand.hbm [shape: f32[8,384], index: 5, kind: output, shape index: {0}]
  %s6 = inlined_call_operand.hbm [shape: s32[8,128], index: 6, kind: output, shape index: {1}]
  %7 = xla_tuple %s5, %s6
  %s8 = sld [smem:[#allocation0]]
  $region58: #{tpu_custom_call.1} parent=0
    _
  %s10 = ssub.s32 1, %s8
  %s11 = scalar_select 0, %s10, %s8
  $region1: #{tpu_custom_call.1} parent=0
    #allocation2 [shape = 'u8[24576]{0}', space=vmem, size = 0x6000, scoped, tag = 'input window, operand 0, single buffered']
    #allocation3 [shape = 's32[1]{0}', space=sflag, size = 0x4, scoped, tag = 'scoped memory for tpu_custom_call.1']
    #allocation4 [shape = 's32[1]{0}', space=sflag, size = 0x4, scoped, tag = 'scoped memory for tpu_custom_call.1']
    #allocation5 [shape = 'u8[1179648]{0}', space=vmem, size = 0x120000, scoped, tag = 'input window, operand 1, single buffered']
    #allocation6 [shape = 's32[1]{0}', space=sflag, size = 0x4, scoped, tag = 'scoped memory for tpu_custom_call.1']
    #allocation7 [shape = 'u8[1536]{0}', space=vmem, size = 0x800, scoped, tag = 'input window, operand 2, single buffered']
    #allocation8 [shape = 'u8[589824]{0}', space=vmem, size = 0x90000, scoped, tag = 'input window, operand 3, single buffered']
    #allocation9 [shape = 's32[1]{0}', space=sflag, size = 0x4, scoped, tag = 'scoped memory for tpu_custom_call.1']
    #allocation10 [shape = 'u8[1536]{0}', space=vmem, size = 0x800, scoped, tag = 'input window, operand 4, single buffered']
    #allocation11 [shape = 'u8[12288]{0}', space=vmem, size = 0x3000, scoped, tag = 'output window, operand 0, single buffered']
    #allocation12 [shape = 'u8[4096]{0}', space=vmem, size = 0x1000, scoped, tag = 'output window, operand 1, single buffered']
    #allocation13 [shape = 's32[1]{0}', space=sflag, size = 0x4, scoped, tag = 'scoped memory for tpu_custom_call.1']
    %12 = vsyncpa [#allocation3], 0
    %13 = vsyncpa [#allocation6], 0
    %14 = vsyncpa [#allocation9], 0
    %15 = vsyncpa [#allocation4], 0
    %16 = vsyncpa [#allocation13], 0
    // Predicated region
    $region2: #{tpu_custom_call.1} parent=1 // pred_check
      _
    $region3: #{tpu_custom_call.1} parent=1 // pred_check_branch
      %18 = sbr.rel (0) target = $region5
    $region4: #{tpu_custom_call.1} parent=1 // pred_region
      %s20 = ssub.s32 768, 768
      %21 = vsyncadd [#allocation3], %s20
      %s23 = sshll.u32 [#allocation2], 4
      %s24 = int_to_ptr.vmem [resolvable:$true] %s23
      %26 = dma.hbm_to_vmem [thread:$0]  %s0, 768, %s24, [#allocation3]
    $region5: #{tpu_custom_call.1} parent=1 // pred_fallthru
      _
    // Predicated region
    $region6: #{tpu_custom_call.1} parent=1 // pred_check
      _
    $region7: #{tpu_custom_call.1} parent=1 // pred_check_branch
      %28 = sbr.rel (0) target = $region9
    $region8: #{tpu_custom_call.1} parent=1 // pred_region
      %s30 = ssub.s32 36864, 36864
      %31 = vsyncadd [#allocation6], %s30
      %s32 = sshll.u32 [#allocation5], 4
      %s33 = int_to_ptr.vmem [resolvable:$true] %s32
      %38 = dma.hbm_to_vmem [thread:$0]  %s1, 36864, %s33, [#allocation6], 384, 384, 24
    $region9: #{tpu_custom_call.1} parent=1 // pred_fallthru
      _
    // Predicated region
    $region10: #{tpu_custom_call.1} parent=1 // pred_check
      _
    $region11: #{tpu_custom_call.1} parent=1 // pred_check_branch
      %40 = sbr.rel (0) target = $region13
    $region12: #{tpu_custom_call.1} parent=1 // pred_region
      %s42 = ssub.s32 48, 48
      %43 = vsyncadd [#allocation6], %s42
      %s45 = sshll.u32 [#allocation7], 4
      %s46 = int_to_ptr.vmem [resolvable:$true] %s45
      %48 = dma.hbm_to_vmem [thread:$0]  %s2, 48, %s46, [#allocation6]
    $region13: #{tpu_custom_call.1} parent=1 // pred_fallthru
      _
    // Predicated region
    $region14: #{tpu_custom_call.1} parent=1 // pred_check
      _
    $region15: #{tpu_custom_call.1} parent=1 // pred_check_branch
      %50 = sbr.rel (0) target = $region17
    $region16: #{tpu_custom_call.1} parent=1 // pred_region
      %s52 = ssub.s32 18432, 18432
      %53 = vsyncadd [#allocation9], %s52
      %s54 = sshll.u32 [#allocation8], 4
      %s55 = int_to_ptr.vmem [resolvable:$true] %s54
      %60 = dma.hbm_to_vmem [thread:$0]  %s3, 18432, %s55, [#allocation9], 384, 384, 24
    $region17: #{tpu_custom_call.1} parent=1 // pred_fallthru
      _
    // Predicated region
    $region18: #{tpu_custom_call.1} parent=1 // pred_check
      _
    $region19: #{tpu_custom_call.1} parent=1 // pred_check_branch
      %62 = sbr.rel (0) target = $region21
    $region20: #{tpu_custom_call.1} parent=1 // pred_region
      %s64 = ssub.s32 48, 48
      %65 = vsyncadd [#allocation9], %s64
      %s67 = sshll.u32 [#allocation10], 4
      %s68 = int_to_ptr.vmem [resolvable:$true] %s67
      %70 = dma.hbm_to_vmem [thread:$0]  %s4, 48, %s68, [#allocation9]
    $region21: #{tpu_custom_call.1} parent=1 // pred_fallthru
      _
    // Predicated region
    $region22: #{tpu_custom_call.1} parent=1 // pred_check
      _
    $region23: #{tpu_custom_call.1} parent=1 // pred_check_branch
      %72 = sbr.rel (0) target = $region25
    $region24: #{tpu_custom_call.1} parent=1 // pred_region
      %73 = dma.done [#allocation3], 768
    $region25: #{tpu_custom_call.1} parent=1 // pred_fallthru
      _
    // Predicated region
    $region26: #{tpu_custom_call.1} parent=1 // pred_check
      _
    $region27: #{tpu_custom_call.1} parent=1 // pred_check_branch
      %75 = sbr.rel (0) target = $region29
    $region28: #{tpu_custom_call.1} parent=1 // pred_region
      %76 = dma.done [#allocation6], 36864
    $region29: #{tpu_custom_call.1} parent=1 // pred_fallthru
      _
    // Predicated region
    $region30: #{tpu_custom_call.1} parent=1 // pred_check
      _
    $region31: #{tpu_custom_call.1} parent=1 // pred_check_branch
      %78 = sbr.rel (0) target = $region33
    $region32: #{tpu_custom_call.1} parent=1 // pred_region
      %79 = dma.done [#allocation6], 48
    $region33: #{tpu_custom_call.1} parent=1 // pred_fallthru
      _
    // Predicated region
    $region34: #{tpu_custom_call.1} parent=1 // pred_check
      _
    $region35: #{tpu_custom_call.1} parent=1 // pred_check_branch
      %81 = sbr.rel (0) target = $region37
    $region36: #{tpu_custom_call.1} parent=1 // pred_region
      %82 = dma.done [#allocation9], 18432
    $region37: #{tpu_custom_call.1} parent=1 // pred_fallthru
      _
    // Predicated region
    $region38: #{tpu_custom_call.1} parent=1 // pred_check
      _
    $region39: #{tpu_custom_call.1} parent=1 // pred_check_branch
      %84 = sbr.rel (0) target = $region41
    $region40: #{tpu_custom_call.1} parent=1 // pred_region
      %85 = dma.done [#allocation9], 48
    $region41: #{tpu_custom_call.1} parent=1 // pred_fallthru
      _
    %v86 = vld [vmem:[#allocation2] sm:$0xff]
    %v87 = vld [vmem:[#allocation2 + $0x8] sm:$0xff]
    %v88 = vld [vmem:[#allocation2 + $0x10] sm:$0xff]
    %v89 = vld [vmem:[#allocation2 + $0x18] sm:$0xff]
    %v90 = vld [vmem:[#allocation2 + $0x20] sm:$0xff]
    %v91 = vld [vmem:[#allocation2 + $0x28] sm:$0xff]
    %v92 = vld [vmem:[#allocation5] sm:$0xff]
    %v93 = vld [vmem:[#allocation5 + $0x8] sm:$0xff]
    %v94 = vld [vmem:[#allocation5 + $0x10] sm:$0xff]
    %v95 = vld [vmem:[#allocation5 + $0x18] sm:$0xff]
    %v96 = vld [vmem:[#allocation5 + $0x20] sm:$0xff]
    %v97 = vld [vmem:[#allocation5 + $0x28] sm:$0xff]
    %v98 = vld [vmem:[#allocation5 + $0x30] sm:$0xff]
    %v99 = vld [vmem:[#allocation5 + $0x38] sm:$0xff]
    %v100 = vld [vmem:[#allocation5 + $0x40] sm:$0xff]
    %v101 = vld [vmem:[#allocation5 + $0x48] sm:$0xff]
    %v102 = vld [vmem:[#allocation5 + $0x50] sm:$0xff]
    %v103 = vld [vmem:[#allocation5 + $0x58] sm:$0xff]
    %v104 = vld [vmem:[#allocation5 + $0x60] sm:$0xff]
    %v105 = vld [vmem:[#allocation5 + $0x68] sm:$0xff]
    %v106 = vld [vmem:[#allocation5 + $0x70] sm:$0xff]
    %v107 = vld [vmem:[#allocation5 + $0x78] sm:$0xff]
    %v108 = vld [vmem:[#allocation5 + $0x80] sm:$0xff]
    %v109 = vld [vmem:[#allocation5 + $0x88] sm:$0xff]
    %v110 = vld [vmem:[#allocation5 + $0x90] sm:$0xff]
    %v111 = vld [vmem:[#allocation5 + $0x98] sm:$0xff]
    %v112 = vld [vmem:[#allocation5 + $0xa0] sm:$0xff]
    %v113 = vld [vmem:[#allocation5 + $0xa8] sm:$0xff]
    %v114 = vld [vmem:[#allocation5 + $0xb0] sm:$0xff]
    %v115 = vld [vmem:[#allocation5 + $0xb8] sm:$0xff]
    %v116 = vld [vmem:[#allocation5 + $0xc0] sm:$0xff]
    %v117 = vld [vmem:[#allocation5 + $0xc8] sm:$0xff]
    %v118 = vld [vmem:[#allocation5 + $0xd0] sm:$0xff]
    %v119 = vld [vmem:[#allocation5 + $0xd8] sm:$0xff]
    %v120 = vld [vmem:[#allocation5 + $0xe0] sm:$0xff]
    %v121 = vld [vmem:[#allocation5 + $0xe8] sm:$0xff]
    %v122 = vld [vmem:[#allocation5 + $0xf0] sm:$0xff]
    %v123 = vld [vmem:[#allocation5 + $0xf8] sm:$0xff]
    %v124 = vld [vmem:[#allocation5 + $0x100] sm:$0xff]
    %v125 = vld [vmem:[#allocation5 + $0x108] sm:$0xff]
    %v126 = vld [vmem:[#allocation5 + $0x110] sm:$0xff]
    %v127 = vld [vmem:[#allocation5 + $0x118] sm:$0xff]
    %v128 = vld [vmem:[#allocation5 + $0x120] sm:$0xff]
    %v129 = vld [vmem:[#allocation5 + $0x128] sm:$0xff]
    %v130 = vld [vmem:[#allocation5 + $0x130] sm:$0xff]
    %v131 = vld [vmem:[#allocation5 + $0x138] sm:$0xff]
    %v132 = vld [vmem:[#allocation5 + $0x140] sm:$0xff]
    %v133 = vld [vmem:[#allocation5 + $0x148] sm:$0xff]
    %v134 = vld [vmem:[#allocation5 + $0x150] sm:$0xff]
    %v135 = vld [vmem:[#allocation5 + $0x158] sm:$0xff]
    %v136 = vld [vmem:[#allocation5 + $0x160] sm:$0xff]
    %v137 = vld [vmem:[#allocation5 + $0x168] sm:$0xff]
    %v138 = vld [vmem:[#allocation5 + $0x170] sm:$0xff]
    %v139 = vld [vmem:[#allocation5 + $0x178] sm:$0xff]
    %v140 = vld [vmem:[#allocation5 + $0x180] sm:$0xff]
    %v141 = vld [vmem:[#allocation5 + $0x188] sm:$0xff]
    %v142 = vld [vmem:[#allocation5 + $0x190] sm:$0xff]
    %v143 = vld [vmem:[#allocation5 + $0x198] sm:$0xff]
    %v144 = vld [vmem:[#allocation5 + $0x1a0] sm:$0xff]
    %v145 = vld [vmem:[#allocation5 + $0x1a8] sm:$0xff]
    %v146 = vld [vmem:[#allocation5 + $0x1b0] sm:$0xff]
    %v147 = vld [vmem:[#allocation5 + $0x1b8] sm:$0xff]
    %v148 = vld [vmem:[#allocation5 + $0x1c0] sm:$0xff]
    %v149 = vld [vmem:[#allocation5 + $0x1c8] sm:$0xff]
    %v150 = vld [vmem:[#allocation5 + $0x1d0] sm:$0xff]
    %v151 = vld [vmem:[#allocation5 + $0x1d8] sm:$0xff]
    %v152 = vld [vmem:[#allocation5 + $0x1e0] sm:$0xff]
    %v153 = vld [vmem:[#allocation5 + $0x1e8] sm:$0xff]
    %v154 = vld [vmem:[#allocation5 + $0x1f0] sm:$0xff]
    %v155 = vld [vmem:[#allocation5 + $0x1f8] sm:$0xff]
    %v156 = vld [vmem:[#allocation5 + $0x200] sm:$0xff]
    %v157 = vld [vmem:[#allocation5 + $0x208] sm:$0xff]
    %v158 = vld [vmem:[#allocation5 + $0x210] sm:$0xff]
    %v159 = vld [vmem:[#allocation5 + $0x218] sm:$0xff]
    %v160 = vld [vmem:[#allocation5 + $0x220] sm:$0xff]
    %v161 = vld [vmem:[#allocation5 + $0x228] sm:$0xff]
    %v162 = vld [vmem:[#allocation5 + $0x230] sm:$0xff]
    %v163 = vld [vmem:[#allocation5 + $0x238] sm:$0xff]
    %v164 = vld [vmem:[#allocation5 + $0x240] sm:$0xff]
    %v165 = vld [vmem:[#allocation5 + $0x248] sm:$0xff]
    %v166 = vld [vmem:[#allocation5 + $0x250] sm:$0xff]
    %v167 = vld [vmem:[#allocation5 + $0x258] sm:$0xff]
    %v168 = vld [vmem:[#allocation5 + $0x260] sm:$0xff]
    %v169 = vld [vmem:[#allocation5 + $0x268] sm:$0xff]
    %v170 = vld [vmem:[#allocation5 + $0x270] sm:$0xff]
    %v171 = vld [vmem:[#allocation5 + $0x278] sm:$0xff]
    %v172 = vld [vmem:[#allocation5 + $0x280] sm:$0xff]
    %v173 = vld [vmem:[#allocation5 + $0x288] sm:$0xff]
    %v174 = vld [vmem:[#allocation5 + $0x290] sm:$0xff]
    %v175 = vld [vmem:[#allocation5 + $0x298] sm:$0xff]
    %v176 = vld [vmem:[#allocation5 + $0x2a0] sm:$0xff]
    %v177 = vld [vmem:[#allocation5 + $0x2a8] sm:$0xff]
    %v178 = vld [vmem:[#allocation5 + $0x2b0] sm:$0xff]
    %v179 = vld [vmem:[#allocation5 + $0x2b8] sm:$0xff]
    %v180 = vld [vmem:[#allocation5 + $0x2c0] sm:$0xff]
    %v181 = vld [vmem:[#allocation5 + $0x2c8] sm:$0xff]
    %v182 = vld [vmem:[#allocation5 + $0x2d0] sm:$0xff]
    %v183 = vld [vmem:[#allocation5 + $0x2d8] sm:$0xff]
    %v184 = vld [vmem:[#allocation5 + $0x2e0] sm:$0xff]
    %v185 = vld [vmem:[#allocation5 + $0x2e8] sm:$0xff]
    %v186 = vld [vmem:[#allocation5 + $0x2f0] sm:$0xff]
    %v187 = vld [vmem:[#allocation5 + $0x2f8] sm:$0xff]
    %v188 = vld [vmem:[#allocation5 + $0x300] sm:$0xff]
    %v189 = vld [vmem:[#allocation5 + $0x308] sm:$0xff]
    %v190 = vld [vmem:[#allocation5 + $0x310] sm:$0xff]
    %v191 = vld [vmem:[#allocation5 + $0x318] sm:$0xff]
    %v192 = vld [vmem:[#allocation5 + $0x320] sm:$0xff]
    %v193 = vld [vmem:[#allocation5 + $0x328] sm:$0xff]
    %v194 = vld [vmem:[#allocation5 + $0x330] sm:$0xff]
    %v195 = vld [vmem:[#allocation5 + $0x338] sm:$0xff]
    %v196 = vld [vmem:[#allocation5 + $0x340] sm:$0xff]
    %v197 = vld [vmem:[#allocation5 + $0x348] sm:$0xff]
    %v198 = vld [vmem:[#allocation5 + $0x350] sm:$0xff]
    %v199 = vld [vmem:[#allocation5 + $0x358] sm:$0xff]
    %v200 = vld [vmem:[#allocation5 + $0x360] sm:$0xff]
    %v201 = vld [vmem:[#allocation5 + $0x368] sm:$0xff]
    %v202 = vld [vmem:[#allocation5 + $0x370] sm:$0xff]
    %v203 = vld [vmem:[#allocation5 + $0x378] sm:$0xff]
    %v204 = vld [vmem:[#allocation5 + $0x380] sm:$0xff]
    %v205 = vld [vmem:[#allocation5 + $0x388] sm:$0xff]
    %v206 = vld [vmem:[#allocation5 + $0x390] sm:$0xff]
    %v207 = vld [vmem:[#allocation5 + $0x398] sm:$0xff]
    %v208 = vld [vmem:[#allocation5 + $0x3a0] sm:$0xff]
    %v209 = vld [vmem:[#allocation5 + $0x3a8] sm:$0xff]
    %v210 = vld [vmem:[#allocation5 + $0x3b0] sm:$0xff]
    %v211 = vld [vmem:[#allocation5 + $0x3b8] sm:$0xff]
    %v212 = vld [vmem:[#allocation5 + $0x3c0] sm:$0xff]
    %v213 = vld [vmem:[#allocation5 + $0x3c8] sm:$0xff]
    %v214 = vld [vmem:[#allocation5 + $0x3d0] sm:$0xff]
    %v215 = vld [vmem:[#allocation5 + $0x3d8] sm:$0xff]
    %v216 = vld [vmem:[#allocation5 + $0x3e0] sm:$0xff]
    %v217 = vld [vmem:[#allocation5 + $0x3e8] sm:$0xff]
    %v218 = vld [vmem:[#allocation5 + $0x3f0] sm:$0xff]
    %v219 = vld [vmem:[#allocation5 + $0x3f8] sm:$0xff]
    %v220 = vld [vmem:[#allocation5 + $0x400] sm:$0xff]
    %v221 = vld [vmem:[#allocation5 + $0x408] sm:$0xff]
    %v222 = vld [vmem:[#allocation5 + $0x410] sm:$0xff]
    %v223 = vld [vmem:[#allocation5 + $0x418] sm:$0xff]
    %v224 = vld [vmem:[#allocation5 + $0x420] sm:$0xff]
    %v225 = vld [vmem:[#allocation5 + $0x428] sm:$0xff]
    %v226 = vld [vmem:[#allocation5 + $0x430] sm:$0xff]
    %v227 = vld [vmem:[#allocation5 + $0x438] sm:$0xff]
    %v228 = vld [vmem:[#allocation5 + $0x440] sm:$0xff]
    %v229 = vld [vmem:[#allocation5 + $0x448] sm:$0xff]
    %v230 = vld [vmem:[#allocation5 + $0x450] sm:$0xff]
    %v231 = vld [vmem:[#allocation5 + $0x458] sm:$0xff]
    %v232 = vld [vmem:[#allocation5 + $0x460] sm:$0xff]
    %v233 = vld [vmem:[#allocation5 + $0x468] sm:$0xff]
    %v234 = vld [vmem:[#allocation5 + $0x470] sm:$0xff]
    %v235 = vld [vmem:[#allocation5 + $0x478] sm:$0xff]
    %v236 = vld [vmem:[#allocation5 + $0x480] sm:$0xff]
    %v237 = vld [vmem:[#allocation5 + $0x488] sm:$0xff]
    %v238 = vld [vmem:[#allocation5 + $0x490] sm:$0xff]
    %v239 = vld [vmem:[#allocation5 + $0x498] sm:$0xff]
    %v240 = vld [vmem:[#allocation5 + $0x4a0] sm:$0xff]
    %v241 = vld [vmem:[#allocation5 + $0x4a8] sm:$0xff]
    %v242 = vld [vmem:[#allocation5 + $0x4b0] sm:$0xff]
    %v243 = vld [vmem:[#allocation5 + $0x4b8] sm:$0xff]
    %v244 = vld [vmem:[#allocation5 + $0x4c0] sm:$0xff]
    %v245 = vld [vmem:[#allocation5 + $0x4c8] sm:$0xff]
    %v246 = vld [vmem:[#allocation5 + $0x4d0] sm:$0xff]
    %v247 = vld [vmem:[#allocation5 + $0x4d8] sm:$0xff]
    %v248 = vld [vmem:[#allocation5 + $0x4e0] sm:$0xff]
    %v249 = vld [vmem:[#allocation5 + $0x4e8] sm:$0xff]
    %v250 = vld [vmem:[#allocation5 + $0x4f0] sm:$0xff]
    %v251 = vld [vmem:[#allocation5 + $0x4f8] sm:$0xff]
    %v252 = vld [vmem:[#allocation5 + $0x500] sm:$0xff]
    %v253 = vld [vmem:[#allocation5 + $0x508] sm:$0xff]
    %v254 = vld [vmem:[#allocation5 + $0x510] sm:$0xff]
    %v255 = vld [vmem:[#allocation5 + $0x518] sm:$0xff]
    %v256 = vld [vmem:[#allocation5 + $0x520] sm:$0xff]
    %v257 = vld [vmem:[#allocation5 + $0x528] sm:$0xff]
    %v258 = vld [vmem:[#allocation5 + $0x530] sm:$0xff]
    %v259 = vld [vmem:[#allocation5 + $0x538] sm:$0xff]
    %v260 = vld [vmem:[#allocation5 + $0x540] sm:$0xff]
    %v261 = vld [vmem:[#allocation5 + $0x548] sm:$0xff]
    %v262 = vld [vmem:[#allocation5 + $0x550] sm:$0xff]
    %v263 = vld [vmem:[#allocation5 + $0x558] sm:$0xff]
    %v264 = vld [vmem:[#allocation5 + $0x560] sm:$0xff]
    %v265 = vld [vmem:[#allocation5 + $0x568] sm:$0xff]
    %v266 = vld [vmem:[#allocation5 + $0x570] sm:$0xff]
    %v267 = vld [vmem:[#allocation5 + $0x578] sm:$0xff]
    %v268 = vld [vmem:[#allocation5 + $0x580] sm:$0xff]
    %v269 = vld [vmem:[#allocation5 + $0x588] sm:$0xff]
    %v270 = vld [vmem:[#allocation5 + $0x590] sm:$0xff]
    %v271 = vld [vmem:[#allocation5 + $0x598] sm:$0xff]
    %v272 = vld [vmem:[#allocation5 + $0x5a0] sm:$0xff]
    %v273 = vld [vmem:[#allocation5 + $0x5a8] sm:$0xff]
    %v274 = vld [vmem:[#allocation5 + $0x5b0] sm:$0xff]
    %v275 = vld [vmem:[#allocation5 + $0x5b8] sm:$0xff]
    %v276 = vld [vmem:[#allocation5 + $0x5c0] sm:$0xff]
    %v277 = vld [vmem:[#allocation5 + $0x5c8] sm:$0xff]
    %v278 = vld [vmem:[#allocation5 + $0x5d0] sm:$0xff]
    %v279 = vld [vmem:[#allocation5 + $0x5d8] sm:$0xff]
    %v280 = vld [vmem:[#allocation5 + $0x5e0] sm:$0xff]
    %v281 = vld [vmem:[#allocation5 + $0x5e8] sm:$0xff]
    %v282 = vld [vmem:[#allocation5 + $0x5f0] sm:$0xff]
    %v283 = vld [vmem:[#allocation5 + $0x5f8] sm:$0xff]
    %v284 = vld [vmem:[#allocation5 + $0x600] sm:$0xff]
    %v285 = vld [vmem:[#allocation5 + $0x608] sm:$0xff]
    %v286 = vld [vmem:[#allocation5 + $0x610] sm:$0xff]
    %v287 = vld [vmem:[#allocation5 + $0x618] sm:$0xff]
    %v288 = vld [vmem:[#allocation5 + $0x620] sm:$0xff]
    %v289 = vld [vmem:[#allocation5 + $0x628] sm:$0xff]
    %v290 = vld [vmem:[#allocation5 + $0x630] sm:$0xff]
    %v291 = vld [vmem:[#allocation5 + $0x638] sm:$0xff]
    %v292 = vld [vmem:[#allocation5 + $0x640] sm:$0xff]
    %v293 = vld [vmem:[#allocation5 + $0x648] sm:$0xff]
    %v294 = vld [vmem:[#allocation5 + $0x650] sm:$0xff]
    %v295 = vld [vmem:[#allocation5 + $0x658] sm:$0xff]
    %v296 = vld [vmem:[#allocation5 + $0x660] sm:$0xff]
    %v297 = vld [vmem:[#allocation5 + $0x668] sm:$0xff]
    %v298 = vld [vmem:[#allocation5 + $0x670] sm:$0xff]
    %v299 = vld [vmem:[#allocation5 + $0x678] sm:$0xff]
    %v300 = vld [vmem:[#allocation5 + $0x680] sm:$0xff]
    %v301 = vld [vmem:[#allocation5 + $0x688] sm:$0xff]
    %v302 = vld [vmem:[#allocation5 + $0x690] sm:$0xff]
    %v303 = vld [vmem:[#allocation5 + $0x698] sm:$0xff]
    %v304 = vld [vmem:[#allocation5 + $0x6a0] sm:$0xff]
    %v305 = vld [vmem:[#allocation5 + $0x6a8] sm:$0xff]
    %v306 = vld [vmem:[#allocation5 + $0x6b0] sm:$0xff]
    %v307 = vld [vmem:[#allocation5 + $0x6b8] sm:$0xff]
    %v308 = vld [vmem:[#allocation5 + $0x6c0] sm:$0xff]
    %v309 = vld [vmem:[#allocation5 + $0x6c8] sm:$0xff]
    %v310 = vld [vmem:[#allocation5 + $0x6d0] sm:$0xff]
    %v311 = vld [vmem:[#allocation5 + $0x6d8] sm:$0xff]
    %v312 = vld [vmem:[#allocation5 + $0x6e0] sm:$0xff]
    %v313 = vld [vmem:[#allocation5 + $0x6e8] sm:$0xff]
    %v314 = vld [vmem:[#allocation5 + $0x6f0] sm:$0xff]
    %v315 = vld [vmem:[#allocation5 + $0x6f8] sm:$0xff]
    %v316 = vld [vmem:[#allocation5 + $0x700] sm:$0xff]
    %v317 = vld [vmem:[#allocation5 + $0x708] sm:$0xff]
    %v318 = vld [vmem:[#allocation5 + $0x710] sm:$0xff]
    %v319 = vld [vmem:[#allocation5 + $0x718] sm:$0xff]
    %v320 = vld [vmem:[#allocation5 + $0x720] sm:$0xff]
    %v321 = vld [vmem:[#allocation5 + $0x728] sm:$0xff]
    %v322 = vld [vmem:[#allocation5 + $0x730] sm:$0xff]
    %v323 = vld [vmem:[#allocation5 + $0x738] sm:$0xff]
    %v324 = vld [vmem:[#allocation5 + $0x740] sm:$0xff]
    %v325 = vld [vmem:[#allocation5 + $0x748] sm:$0xff]
    %v326 = vld [vmem:[#allocation5 + $0x750] sm:$0xff]
    %v327 = vld [vmem:[#allocation5 + $0x758] sm:$0xff]
    %v328 = vld [vmem:[#allocation5 + $0x760] sm:$0xff]
    %v329 = vld [vmem:[#allocation5 + $0x768] sm:$0xff]
    %v330 = vld [vmem:[#allocation5 + $0x770] sm:$0xff]
    %v331 = vld [vmem:[#allocation5 + $0x778] sm:$0xff]
    %v332 = vld [vmem:[#allocation5 + $0x780] sm:$0xff]
    %v333 = vld [vmem:[#allocation5 + $0x788] sm:$0xff]
    %v334 = vld [vmem:[#allocation5 + $0x790] sm:$0xff]
    %v335 = vld [vmem:[#allocation5 + $0x798] sm:$0xff]
    %v336 = vld [vmem:[#allocation5 + $0x7a0] sm:$0xff]
    %v337 = vld [vmem:[#allocation5 + $0x7a8] sm:$0xff]
    %v338 = vld [vmem:[#allocation5 + $0x7b0] sm:$0xff]
    %v339 = vld [vmem:[#allocation5 + $0x7b8] sm:$0xff]
    %v340 = vld [vmem:[#allocation5 + $0x7c0] sm:$0xff]
    %v341 = vld [vmem:[#allocation5 + $0x7c8] sm:$0xff]
    %v342 = vld [vmem:[#allocation5 + $0x7d0] sm:$0xff]
    %v343 = vld [vmem:[#allocation5 + $0x7d8] sm:$0xff]
    %v344 = vld [vmem:[#allocation5 + $0x7e0] sm:$0xff]
    %v345 = vld [vmem:[#allocation5 + $0x7e8] sm:$0xff]
    %v346 = vld [vmem:[#allocation5 + $0x7f0] sm:$0xff]
    %v347 = vld [vmem:[#allocation5 + $0x7f8] sm:$0xff]
    %v348 = vld [vmem:[#allocation5 + $0x800] sm:$0xff]
    %v349 = vld [vmem:[#allocation5 + $0x808] sm:$0xff]
    %v350 = vld [vmem:[#allocation5 + $0x810] sm:$0xff]
    %v351 = vld [vmem:[#allocation5 + $0x818] sm:$0xff]
    %v352 = vld [vmem:[#allocation5 + $0x820] sm:$0xff]
    %v353 = vld [vmem:[#allocation5 + $0x828] sm:$0xff]
    %v354 = vld [vmem:[#allocation5 + $0x830] sm:$0xff]
    %v355 = vld [vmem:[#allocation5 + $0x838] sm:$0xff]
    %v356 = vld [vmem:[#allocation5 + $0x840] sm:$0xff]
    %v357 = vld [vmem:[#allocation5 + $0x848] sm:$0xff]
    %v358 = vld [vmem:[#allocation5 + $0x850] sm:$0xff]
    %v359 = vld [vmem:[#allocation5 + $0x858] sm:$0xff]
    %v360 = vld [vmem:[#allocation5 + $0x860] sm:$0xff]
    %v361 = vld [vmem:[#allocation5 + $0x868] sm:$0xff]
    %v362 = vld [vmem:[#allocation5 + $0x870] sm:$0xff]
    %v363 = vld [vmem:[#allocation5 + $0x878] sm:$0xff]
    %v364 = vld [vmem:[#allocation5 + $0x880] sm:$0xff]
    %v365 = vld [vmem:[#allocation5 + $0x888] sm:$0xff]
    %v366 = vld [vmem:[#allocation5 + $0x890] sm:$0xff]
    %v367 = vld [vmem:[#allocation5 + $0x898] sm:$0xff]
    %v368 = vld [vmem:[#allocation5 + $0x8a0] sm:$0xff]
    %v369 = vld [vmem:[#allocation5 + $0x8a8] sm:$0xff]
    %v370 = vld [vmem:[#allocation5 + $0x8b0] sm:$0xff]
    %v371 = vld [vmem:[#allocation5 + $0x8b8] sm:$0xff]
    %v372 = vld [vmem:[#allocation5 + $0x8c0] sm:$0xff]
    %v373 = vld [vmem:[#allocation5 + $0x8c8] sm:$0xff]
    %v374 = vld [vmem:[#allocation5 + $0x8d0] sm:$0xff]
    %v375 = vld [vmem:[#allocation5 + $0x8d8] sm:$0xff]
    %v376 = vld [vmem:[#allocation5 + $0x8e0] sm:$0xff]
    %v377 = vld [vmem:[#allocation5 + $0x8e8] sm:$0xff]
    %v378 = vld [vmem:[#allocation5 + $0x8f0] sm:$0xff]
    %v379 = vld [vmem:[#allocation5 + $0x8f8] sm:$0xff]
    %v380 = vld [vmem:[#allocation7] sm:$0x7]
    %v382 = vlaneseq
    %v383 = vshrl.u32 %v382, 7
    %v384 = vsub.s32 0, %v383
    %v385 = vrot.slane %v380, %v384
    %v386 = vlaneseq
    %v387 = vshrl.u32 %v386, 7
    %v388 = vsub.s32 1, %v387
    %v389 = vrot.slane %v380, %v388
    %v390 = vlaneseq
    %v391 = vshrl.u32 %v390, 7
    %v392 = vsub.s32 2, %v391
    %v393 = vrot.slane %v380, %v392
    %397 = vmatprep.subr.mxu0 %v138
    %398 = vmatpush1.msra.mxu0 %v137
    %399 = vmatprep.subr.mxu0 %v135
    %400 = vmatpush1.msra.mxu0 %v134
    %401 = vmatprep.subr.mxu0 %v132
    %402 = vmatpush1.msra.mxu0 %v131
    %403 = vmatprep.subr.mxu0 %v129
    %404 = vmatpush1.msra.mxu0 %v128
    %405 = vmatprep.subr.mxu0 %v126
    %406 = vmatpush1.msra.mxu0 %v125
    %407 = vmatprep.subr.mxu0 %v123
    %408 = vmatpush1.msra.mxu0 %v122
    %409 = vmatprep.subr.mxu0 %v120
    %410 = vmatpush1.msra.mxu0 %v119
    %411 = vmatprep.subr.mxu0 %v117
    %412 = vmatpush1.msra.mxu0 %v116
    %413 = vmatprep.subr.mxu0 %v114
    %414 = vmatpush1.msra.mxu0 %v113
    %415 = vmatprep.subr.mxu0 %v111
    %416 = vmatpush1.msra.mxu0 %v110
    %417 = vmatprep.subr.mxu0 %v108
    %418 = vmatpush1.msra.mxu0 %v107
    %419 = vmatprep.subr.mxu0 %v105
    %420 = vmatpush1.msra.mxu0 %v104
    %421 = vmatprep.subr.mxu0 %v102
    %422 = vmatpush1.msra.mxu0 %v101
    %423 = vmatprep.subr.mxu0 %v99
    %424 = vmatpush1.msra.mxu0 %v98
    %425 = vmatprep.subr.mxu0 %v96
    %426 = vmatpush1.msra.mxu0 %v95
    %427 = vmatprep.subr.mxu0 %v93
    %428 = vmatpush1.msra.mxu0 %v92
    %429 = vmatprep.subr.mxu0 %v186
    %430 = vmatpush2.msra.mxu0 %v185
    %431 = vmatprep.subr.mxu0 %v183
    %432 = vmatpush2.msra.mxu0 %v182
    %433 = vmatprep.subr.mxu0 %v180
    %434 = vmatpush2.msra.mxu0 %v179
    %435 = vmatprep.subr.mxu0 %v177
    %436 = vmatpush2.msra.mxu0 %v176
    %437 = vmatprep.subr.mxu0 %v174
    %438 = vmatpush2.msra.mxu0 %v173
    %439 = vmatprep.subr.mxu0 %v171
    %440 = vmatpush2.msra.mxu0 %v170
    %441 = vmatprep.subr.mxu0 %v168
    %442 = vmatpush2.msra.mxu0 %v167
    %443 = vmatprep.subr.mxu0 %v165
    %444 = vmatpush2.msra.mxu0 %v164
    %445 = vmatprep.subr.mxu0 %v162
    %446 = vmatpush2.msra.mxu0 %v161
    %447 = vmatprep.subr.mxu0 %v159
    %448 = vmatpush2.msra.mxu0 %v158
    %449 = vmatprep.subr.mxu0 %v156
    %450 = vmatpush2.msra.mxu0 %v155
    %451 = vmatprep.subr.mxu0 %v153
    %452 = vmatpush2.msra.mxu0 %v152
    %453 = vmatprep.subr.mxu0 %v150
    %454 = vmatpush2.msra.mxu0 %v149
    %455 = vmatprep.subr.mxu0 %v147
    %456 = vmatpush2.msra.mxu0 %v146
    %457 = vmatprep.subr.mxu0 %v144
    %458 = vmatpush2.msra.mxu0 %v143
    %459 = vmatprep.subr.mxu0 %v141
    %460 = vmatpush2.msra.mxu0 %v140
    %461 = vmatprep.mubr.f32.mxu0 %v87
    %462 = vmatmul.mubr.f32.gmra.mxu0 %v86
    %v463 = vpop.f32.mrf.mxu0
    %v464 = vadd.f32 %v385, %v463
    %v465 = vpop.f32.mrf.mxu0
    %v466 = vadd.f32 %v389, %v465
    %467 = vdwg.mxu0
    %468 = vmatprep.subr.mxu0 %v234
    %469 = vmatpush1.msra.mxu0 %v233
    %470 = vmatprep.subr.mxu0 %v231
    %471 = vmatpush1.msra.mxu0 %v230
    %472 = vmatprep.subr.mxu0 %v228
    %473 = vmatpush1.msra.mxu0 %v227
    %474 = vmatprep.subr.mxu0 %v225
    %475 = vmatpush1.msra.mxu0 %v224
    %476 = vmatprep.subr.mxu0 %v222
    %477 = vmatpush1.msra.mxu0 %v221
    %478 = vmatprep.subr.mxu0 %v219
    %479 = vmatpush1.msra.mxu0 %v218
    %480 = vmatprep.subr.mxu0 %v216
    %481 = vmatpush1.msra.mxu0 %v215
    %482 = vmatprep.subr.mxu0 %v213
    %483 = vmatpush1.msra.mxu0 %v212
    %484 = vmatprep.subr.mxu0 %v210
    %485 = vmatpush1.msra.mxu0 %v209
    %486 = vmatprep.subr.mxu0 %v207
    %487 = vmatpush1.msra.mxu0 %v206
    %488 = vmatprep.subr.mxu0 %v204
    %489 = vmatpush1.msra.mxu0 %v203
    %490 = vmatprep.subr.mxu0 %v201
    %491 = vmatpush1.msra.mxu0 %v200
    %492 = vmatprep.subr.mxu0 %v198
    %493 = vmatpush1.msra.mxu0 %v197
    %494 = vmatprep.subr.mxu0 %v195
    %495 = vmatpush1.msra.mxu0 %v194
    %496 = vmatprep.subr.mxu0 %v192
    %497 = vmatpush1.msra.mxu0 %v191
    %498 = vmatprep.subr.mxu0 %v189
    %499 = vmatpush1.msra.mxu0 %v188
    %500 = vmatprep.subr.mxu0 %v282
    %501 = vmatpush2.msra.mxu0 %v281
    %502 = vmatprep.subr.mxu0 %v279
    %503 = vmatpush2.msra.mxu0 %v278
    %504 = vmatprep.subr.mxu0 %v276
    %505 = vmatpush2.msra.mxu0 %v275
    %506 = vmatprep.subr.mxu0 %v273
    %507 = vmatpush2.msra.mxu0 %v272
    %508 = vmatprep.subr.mxu0 %v270
    %509 = vmatpush2.msra.mxu0 %v269
    %510 = vmatprep.subr.mxu0 %v267
    %511 = vmatpush2.msra.mxu0 %v266
    %512 = vmatprep.subr.mxu0 %v264
    %513 = vmatpush2.msra.mxu0 %v263
    %514 = vmatprep.subr.mxu0 %v261
    %515 = vmatpush2.msra.mxu0 %v260
    %516 = vmatprep.subr.mxu0 %v258
    %517 = vmatpush2.msra.mxu0 %v257
    %518 = vmatprep.subr.mxu0 %v255
    %519 = vmatpush2.msra.mxu0 %v254
    %520 = vmatprep.subr.mxu0 %v252
    %521 = vmatpush2.msra.mxu0 %v251
    %522 = vmatprep.subr.mxu0 %v249
    %523 = vmatpush2.msra.mxu0 %v248
    %524 = vmatprep.subr.mxu0 %v246
    %525 = vmatpush2.msra.mxu0 %v245
    %526 = vmatprep.subr.mxu0 %v243
    %527 = vmatpush2.msra.mxu0 %v242
    %528 = vmatprep.subr.mxu0 %v240
    %529 = vmatpush2.msra.mxu0 %v239
    %530 = vmatprep.subr.mxu0 %v237
    %531 = vmatpush2.msra.mxu0 %v236
    %532 = vmatprep.mubr.f32.mxu0 %v89
    %533 = vmatmul.mubr.f32.gmra.mxu0 %v88
    %v534 = vpop.f32.mrf.mxu0
    %v535 = vadd.f32 %v464, %v534
    %v536 = vpop.f32.mrf.mxu0
    %v537 = vadd.f32 %v466, %v536
    %538 = vdwg.mxu0
    %539 = vmatprep.subr.mxu0 %v330
    %540 = vmatpush1.msra.mxu0 %v329
    %541 = vmatprep.subr.mxu0 %v327
    %542 = vmatpush1.msra.mxu0 %v326
    %543 = vmatprep.subr.mxu0 %v324
    %544 = vmatpush1.msra.mxu0 %v323
    %545 = vmatprep.subr.mxu0 %v321
    %546 = vmatpush1.msra.mxu0 %v320
    %547 = vmatprep.subr.mxu0 %v318
    %548 = vmatpush1.msra.mxu0 %v317
    %549 = vmatprep.subr.mxu0 %v315
    %550 = vmatpush1.msra.mxu0 %v314
    %551 = vmatprep.subr.mxu0 %v312
    %552 = vmatpush1.msra.mxu0 %v311
    %553 = vmatprep.subr.mxu0 %v309
    %554 = vmatpush1.msra.mxu0 %v308
    %555 = vmatprep.subr.mxu0 %v306
    %556 = vmatpush1.msra.mxu0 %v305
    %557 = vmatprep.subr.mxu0 %v303
    %558 = vmatpush1.msra.mxu0 %v302
    %559 = vmatprep.subr.mxu0 %v300
    %560 = vmatpush1.msra.mxu0 %v299
    %561 = vmatprep.subr.mxu0 %v297
    %562 = vmatpush1.msra.mxu0 %v296
    %563 = vmatprep.subr.mxu0 %v294
    %564 = vmatpush1.msra.mxu0 %v293
    %565 = vmatprep.subr.mxu0 %v291
    %566 = vmatpush1.msra.mxu0 %v290
    %567 = vmatprep.subr.mxu0 %v288
    %568 = vmatpush1.msra.mxu0 %v287
    %569 = vmatprep.subr.mxu0 %v285
    %570 = vmatpush1.msra.mxu0 %v284
    %571 = vmatprep.subr.mxu0 %v378
    %572 = vmatpush2.msra.mxu0 %v377
    %573 = vmatprep.subr.mxu0 %v375
    %574 = vmatpush2.msra.mxu0 %v374
    %575 = vmatprep.subr.mxu0 %v372
    %576 = vmatpush2.msra.mxu0 %v371
    %577 = vmatprep.subr.mxu0 %v369
    %578 = vmatpush2.msra.mxu0 %v368
    %579 = vmatprep.subr.mxu0 %v366
    %580 = vmatpush2.msra.mxu0 %v365
    %581 = vmatprep.subr.mxu0 %v363
    %582 = vmatpush2.msra.mxu0 %v362
    %583 = vmatprep.subr.mxu0 %v360
    %584 = vmatpush2.msra.mxu0 %v359
    %585 = vmatprep.subr.mxu0 %v357
    %586 = vmatpush2.msra.mxu0 %v356
    %587 = vmatprep.subr.mxu0 %v354
    %588 = vmatpush2.msra.mxu0 %v353
    %589 = vmatprep.subr.mxu0 %v351
    %590 = vmatpush2.msra.mxu0 %v350
    %591 = vmatprep.subr.mxu0 %v348
    %592 = vmatpush2.msra.mxu0 %v347
    %593 = vmatprep.subr.mxu0 %v345
    %594 = vmatpush2.msra.mxu0 %v344
    %595 = vmatprep.subr.mxu0 %v342
    %596 = vmatpush2.msra.mxu0 %v341
    %597 = vmatprep.subr.mxu0 %v339
    %598 = vmatpush2.msra.mxu0 %v338
    %599 = vmatprep.subr.mxu0 %v336
    %600 = vmatpush2.msra.mxu0 %v335
    %601 = vmatprep.subr.mxu0 %v333
    %602 = vmatpush2.msra.mxu0 %v332
    %603 = vmatprep.mubr.f32.mxu0 %v91
    %604 = vmatmul.mubr.f32.gmra.mxu0 %v90
    %v605 = vpop.f32.mrf.mxu0
    %v606 = vadd.f32 %v535, %v605
    %v607 = vpop.f32.mrf.mxu0
    %v608 = vadd.f32 %v537, %v607
    %609 = vdwg.mxu0
    %610 = vmatprep.subr.mxu0 0.0
    %611 = vmatpush1.msra.mxu0 %v139
    %612 = vmatprep.subr.mxu0 0.0
    %613 = vmatpush1.msra.mxu0 %v136
    %614 = vmatprep.subr.mxu0 0.0
    %615 = vmatpush1.msra.mxu0 %v133
    %616 = vmatprep.subr.mxu0 0.0
    %617 = vmatpush1.msra.mxu0 %v130
    %618 = vmatprep.subr.mxu0 0.0
    %619 = vmatpush1.msra.mxu0 %v127
    %620 = vmatprep.subr.mxu0 0.0
    %621 = vmatpush1.msra.mxu0 %v124
    %622 = vmatprep.subr.mxu0 0.0
    %623 = vmatpush1.msra.mxu0 %v121
    %624 = vmatprep.subr.mxu0 0.0
    %625 = vmatpush1.msra.mxu0 %v118
    %626 = vmatprep.subr.mxu0 0.0
    %627 = vmatpush1.msra.mxu0 %v115
    %628 = vmatprep.subr.mxu0 0.0
    %629 = vmatpush1.msra.mxu0 %v112
    %630 = vmatprep.subr.mxu0 0.0
    %631 = vmatpush1.msra.mxu0 %v109
    %632 = vmatprep.subr.mxu0 0.0
    %633 = vmatpush1.msra.mxu0 %v106
    %634 = vmatprep.subr.mxu0 0.0
    %635 = vmatpush1.msra.mxu0 %v103
    %636 = vmatprep.subr.mxu0 0.0
    %637 = vmatpush1.msra.mxu0 %v100
    %638 = vmatprep.subr.mxu0 0.0
    %639 = vmatpush1.msra.mxu0 %v97
    %640 = vmatprep.subr.mxu0 0.0
    %641 = vmatpush1.msra.mxu0 %v94
    %642 = vmatprep.subr.mxu0 0.0
    %643 = vmatpush2.msra.mxu0 %v187
    %644 = vmatprep.subr.mxu0 0.0
    %645 = vmatpush2.msra.mxu0 %v184
    %646 = vmatprep.subr.mxu0 0.0
    %647 = vmatpush2.msra.mxu0 %v181
    %648 = vmatprep.subr.mxu0 0.0
    %649 = vmatpush2.msra.mxu0 %v178
    %650 = vmatprep.subr.mxu0 0.0
    %651 = vmatpush2.msra.mxu0 %v175
    %652 = vmatprep.subr.mxu0 0.0
    %653 = vmatpush2.msra.mxu0 %v172
    %654 = vmatprep.subr.mxu0 0.0
    %655 = vmatpush2.msra.mxu0 %v169
    %656 = vmatprep.subr.mxu0 0.0
    %657 = vmatpush2.msra.mxu0 %v166
    %658 = vmatprep.subr.mxu0 0.0
    %659 = vmatpush2.msra.mxu0 %v163
    %660 = vmatprep.subr.mxu0 0.0
    %661 = vmatpush2.msra.mxu0 %v160
    %662 = vmatprep.subr.mxu0 0.0
    %663 = vmatpush2.msra.mxu0 %v157
    %664 = vmatprep.subr.mxu0 0.0
    %665 = vmatpush2.msra.mxu0 %v154
    %666 = vmatprep.subr.mxu0 0.0
    %667 = vmatpush2.msra.mxu0 %v151
    %668 = vmatprep.subr.mxu0 0.0
    %669 = vmatpush2.msra.mxu0 %v148
    %670 = vmatprep.subr.mxu0 0.0
    %671 = vmatpush2.msra.mxu0 %v145
    %672 = vmatprep.subr.mxu0 0.0
    %673 = vmatpush2.msra.mxu0 %v142
    %674 = vmatprep.mubr.f32.mxu0 %v87
    %675 = vmatmul.mubr.f32.gmra.mxu0 %v86
    %v676 = vpop.f32.mrf.mxu0
    %v677 = vadd.f32 %v393, %v676
    %v678 = vpop.f32.mrf.mxu0
    %679 = vdwg.mxu0
    %680 = vmatprep.subr.mxu0 0.0
    %681 = vmatpush1.msra.mxu0 %v235
    %682 = vmatprep.subr.mxu0 0.0
    %683 = vmatpush1.msra.mxu0 %v232
    %684 = vmatprep.subr.mxu0 0.0
    %685 = vmatpush1.msra.mxu0 %v229
    %686 = vmatprep.subr.mxu0 0.0
    %687 = vmatpush1.msra.mxu0 %v226
    %688 = vmatprep.subr.mxu0 0.0
    %689 = vmatpush1.msra.mxu0 %v223
    %690 = vmatprep.subr.mxu0 0.0
    %691 = vmatpush1.msra.mxu0 %v220
    %692 = vmatprep.subr.mxu0 0.0
    %693 = vmatpush1.msra.mxu0 %v217
    %694 = vmatprep.subr.mxu0 0.0
    %695 = vmatpush1.msra.mxu0 %v214
    %696 = vmatprep.subr.mxu0 0.0
    %697 = vmatpush1.msra.mxu0 %v211
    %698 = vmatprep.subr.mxu0 0.0
    %699 = vmatpush1.msra.mxu0 %v208
    %700 = vmatprep.subr.mxu0 0.0
    %701 = vmatpush1.msra.mxu0 %v205
    %702 = vmatprep.subr.mxu0 0.0
    %703 = vmatpush1.msra.mxu0 %v202
    %704 = vmatprep.subr.mxu0 0.0
    %705 = vmatpush1.msra.mxu0 %v199
    %706 = vmatprep.subr.mxu0 0.0
    %707 = vmatpush1.msra.mxu0 %v196
    %708 = vmatprep.subr.mxu0 0.0
    %709 = vmatpush1.msra.mxu0 %v193
    %710 = vmatprep.subr.mxu0 0.0
    %711 = vmatpush1.msra.mxu0 %v190
    %712 = vmatprep.subr.mxu0 0.0
    %713 = vmatpush2.msra.mxu0 %v283
    %714 = vmatprep.subr.mxu0 0.0
    %715 = vmatpush2.msra.mxu0 %v280
    %716 = vmatprep.subr.mxu0 0.0
    %717 = vmatpush2.msra.mxu0 %v277
    %718 = vmatprep.subr.mxu0 0.0
    %719 = vmatpush2.msra.mxu0 %v274
    %720 = vmatprep.subr.mxu0 0.0
    %721 = vmatpush2.msra.mxu0 %v271
    %722 = vmatprep.subr.mxu0 0.0
    %723 = vmatpush2.msra.mxu0 %v268
    %724 = vmatprep.subr.mxu0 0.0
    %725 = vmatpush2.msra.mxu0 %v265
    %726 = vmatprep.subr.mxu0 0.0
    %727 = vmatpush2.msra.mxu0 %v262
    %728 = vmatprep.subr.mxu0 0.0
    %729 = vmatpush2.msra.mxu0 %v259
    %730 = vmatprep.subr.mxu0 0.0
    %731 = vmatpush2.msra.mxu0 %v256
    %732 = vmatprep.subr.mxu0 0.0
    %733 = vmatpush2.msra.mxu0 %v253
    %734 = vmatprep.subr.mxu0 0.0
    %735 = vmatpush2.msra.mxu0 %v250
    %736 = vmatprep.subr.mxu0 0.0
    %737 = vmatpush2.msra.mxu0 %v247
    %738 = vmatprep.subr.mxu0 0.0
    %739 = vmatpush2.msra.mxu0 %v244
    %740 = vmatprep.subr.mxu0 0.0
    %741 = vmatpush2.msra.mxu0 %v241
    %742 = vmatprep.subr.mxu0 0.0
    %743 = vmatpush2.msra.mxu0 %v238
    %744 = vmatprep.mubr.f32.mxu0 %v89
    %745 = vmatmul.mubr.f32.gmra.mxu0 %v88
    %v746 = vpop.f32.mrf.mxu0
    %v747 = vadd.f32 %v677, %v746
    %v748 = vpop.f32.mrf.mxu0
    %749 = vdwg.mxu0
    %750 = vmatprep.subr.mxu0 0.0
    %751 = vmatpush1.msra.mxu0 %v331
    %752 = vmatprep.subr.mxu0 0.0
    %753 = vmatpush1.msra.mxu0 %v328
    %754 = vmatprep.subr.mxu0 0.0
    %755 = vmatpush1.msra.mxu0 %v325
    %756 = vmatprep.subr.mxu0 0.0
    %757 = vmatpush1.msra.mxu0 %v322
    %758 = vmatprep.subr.mxu0 0.0
    %759 = vmatpush1.msra.mxu0 %v319
    %760 = vmatprep.subr.mxu0 0.0
    %761 = vmatpush1.msra.mxu0 %v316
    %762 = vmatprep.subr.mxu0 0.0
    %763 = vmatpush1.msra.mxu0 %v313
    %764 = vmatprep.subr.mxu0 0.0
    %765 = vmatpush1.msra.mxu0 %v310
    %766 = vmatprep.subr.mxu0 0.0
    %767 = vmatpush1.msra.mxu0 %v307
    %768 = vmatprep.subr.mxu0 0.0
    %769 = vmatpush1.msra.mxu0 %v304
    %770 = vmatprep.subr.mxu0 0.0
    %771 = vmatpush1.msra.mxu0 %v301
    %772 = vmatprep.subr.mxu0 0.0
    %773 = vmatpush1.msra.mxu0 %v298
    %774 = vmatprep.subr.mxu0 0.0
    %775 = vmatpush1.msra.mxu0 %v295
    %776 = vmatprep.subr.mxu0 0.0
    %777 = vmatpush1.msra.mxu0 %v292
    %778 = vmatprep.subr.mxu0 0.0
    %779 = vmatpush1.msra.mxu0 %v289
    %780 = vmatprep.subr.mxu0 0.0
    %781 = vmatpush1.msra.mxu0 %v286
    %782 = vmatprep.subr.mxu0 0.0
    %783 = vmatpush2.msra.mxu0 %v379
    %784 = vmatprep.subr.mxu0 0.0
    %785 = vmatpush2.msra.mxu0 %v376
    %786 = vmatprep.subr.mxu0 0.0
    %787 = vmatpush2.msra.mxu0 %v373
    %788 = vmatprep.subr.mxu0 0.0
    %789 = vmatpush2.msra.mxu0 %v370
    %790 = vmatprep.subr.mxu0 0.0
    %791 = vmatpush2.msra.mxu0 %v367
    %792 = vmatprep.subr.mxu0 0.0
    %793 = vmatpush2.msra.mxu0 %v364
    %794 = vmatprep.subr.mxu0 0.0
    %795 = vmatpush2.msra.mxu0 %v361
    %796 = vmatprep.subr.mxu0 0.0
    %797 = vmatpush2.msra.mxu0 %v358
    %798 = vmatprep.subr.mxu0 0.0
    %799 = vmatpush2.msra.mxu0 %v355
    %800 = vmatprep.subr.mxu0 0.0
    %801 = vmatpush2.msra.mxu0 %v352
    %802 = vmatprep.subr.mxu0 0.0
    %803 = vmatpush2.msra.mxu0 %v349
    %804 = vmatprep.subr.mxu0 0.0
    %805 = vmatpush2.msra.mxu0 %v346
    %806 = vmatprep.subr.mxu0 0.0
    %807 = vmatpush2.msra.mxu0 %v343
    %808 = vmatprep.subr.mxu0 0.0
    %809 = vmatpush2.msra.mxu0 %v340
    %810 = vmatprep.subr.mxu0 0.0
    %811 = vmatpush2.msra.mxu0 %v337
    %812 = vmatprep.subr.mxu0 0.0
    %813 = vmatpush2.msra.mxu0 %v334
    %814 = vmatprep.mubr.f32.mxu0 %v91
    %815 = vmatmul.mubr.f32.gmra.mxu0 %v90
    %v816 = vpop.f32.mrf.mxu0
    %v817 = vadd.f32 %v747, %v816
    %v818 = vpop.f32.mrf.mxu0
    %819 = vdwg.mxu0
    %v820 = vld [vmem:[#allocation8] sm:$0xff]
    %v821 = vld [vmem:[#allocation8 + $0x8] sm:$0xff]
    %v822 = vld [vmem:[#allocation8 + $0x10] sm:$0xff]
    %v823 = vld [vmem:[#allocation8 + $0x18] sm:$0xff]
    %v824 = vld [vmem:[#allocation8 + $0x20] sm:$0xff]
    %v825 = vld [vmem:[#allocation8 + $0x28] sm:$0xff]
    %v826 = vld [vmem:[#allocation8 + $0x30] sm:$0xff]
    %v827 = vld [vmem:[#allocation8 + $0x38] sm:$0xff]
    %v828 = vld [vmem:[#allocation8 + $0x40] sm:$0xff]
    %v829 = vld [vmem:[#allocation8 + $0x48] sm:$0xff]
    %v830 = vld [vmem:[#allocation8 + $0x50] sm:$0xff]
    %v831 = vld [vmem:[#allocation8 + $0x58] sm:$0xff]
    %v832 = vld [vmem:[#allocation8 + $0x60] sm:$0xff]
    %v833 = vld [vmem:[#allocation8 + $0x68] sm:$0xff]
    %v834 = vld [vmem:[#allocation8 + $0x70] sm:$0xff]
    %v835 = vld [vmem:[#allocation8 + $0x78] sm:$0xff]
    %v836 = vld [vmem:[#allocation8 + $0x80] sm:$0xff]
    %v837 = vld [vmem:[#allocation8 + $0x88] sm:$0xff]
    %v838 = vld [vmem:[#allocation8 + $0x90] sm:$0xff]
    %v839 = vld [vmem:[#allocation8 + $0x98] sm:$0xff]
    %v840 = vld [vmem:[#allocation8 + $0xa0] sm:$0xff]
    %v841 = vld [vmem:[#allocation8 + $0xa8] sm:$0xff]
    %v842 = vld [vmem:[#allocation8 + $0xb0] sm:$0xff]
    %v843 = vld [vmem:[#allocation8 + $0xb8] sm:$0xff]
    %v844 = vld [vmem:[#allocation8 + $0xc0] sm:$0xff]
    %v845 = vld [vmem:[#allocation8 + $0xc8] sm:$0xff]
    %v846 = vld [vmem:[#allocation8 + $0xd0] sm:$0xff]
    %v847 = vld [vmem:[#allocation8 + $0xd8] sm:$0xff]
    %v848 = vld [vmem:[#allocation8 + $0xe0] sm:$0xff]
    %v849 = vld [vmem:[#allocation8 + $0xe8] sm:$0xff]
    %v850 = vld [vmem:[#allocation8 + $0xf0] sm:$0xff]
    %v851 = vld [vmem:[#allocation8 + $0xf8] sm:$0xff]
    %v852 = vld [vmem:[#allocation8 + $0x100] sm:$0xff]
    %v853 = vld [vmem:[#allocation8 + $0x108] sm:$0xff]
    %v854 = vld [vmem:[#allocation8 + $0x110] sm:$0xff]
    %v855 = vld [vmem:[#allocation8 + $0x118] sm:$0xff]
    %v856 = vld [vmem:[#allocation8 + $0x120] sm:$0xff]
    %v857 = vld [vmem:[#allocation8 + $0x128] sm:$0xff]
    %v858 = vld [vmem:[#allocation8 + $0x130] sm:$0xff]
    %v859 = vld [vmem:[#allocation8 + $0x138] sm:$0xff]
    %v860 = vld [vmem:[#allocation8 + $0x140] sm:$0xff]
    %v861 = vld [vmem:[#allocation8 + $0x148] sm:$0xff]
    %v862 = vld [vmem:[#allocation8 + $0x150] sm:$0xff]
    %v863 = vld [vmem:[#allocation8 + $0x158] sm:$0xff]
    %v864 = vld [vmem:[#allocation8 + $0x160] sm:$0xff]
    %v865 = vld [vmem:[#allocation8 + $0x168] sm:$0xff]
    %v866 = vld [vmem:[#allocation8 + $0x170] sm:$0xff]
    %v867 = vld [vmem:[#allocation8 + $0x178] sm:$0xff]
    %v868 = vld [vmem:[#allocation8 + $0x180] sm:$0xff]
    %v869 = vld [vmem:[#allocation8 + $0x188] sm:$0xff]
    %v870 = vld [vmem:[#allocation8 + $0x190] sm:$0xff]
    %v871 = vld [vmem:[#allocation8 + $0x198] sm:$0xff]
    %v872 = vld [vmem:[#allocation8 + $0x1a0] sm:$0xff]
    %v873 = vld [vmem:[#allocation8 + $0x1a8] sm:$0xff]
    %v874 = vld [vmem:[#allocation8 + $0x1b0] sm:$0xff]
    %v875 = vld [vmem:[#allocation8 + $0x1b8] sm:$0xff]
    %v876 = vld [vmem:[#allocation8 + $0x1c0] sm:$0xff]
    %v877 = vld [vmem:[#allocation8 + $0x1c8] sm:$0xff]
    %v878 = vld [vmem:[#allocation8 + $0x1d0] sm:$0xff]
    %v879 = vld [vmem:[#allocation8 + $0x1d8] sm:$0xff]
    %v880 = vld [vmem:[#allocation8 + $0x1e0] sm:$0xff]
    %v881 = vld [vmem:[#allocation8 + $0x1e8] sm:$0xff]
    %v882 = vld [vmem:[#allocation8 + $0x1f0] sm:$0xff]
    %v883 = vld [vmem:[#allocation8 + $0x1f8] sm:$0xff]
    %v884 = vld [vmem:[#allocation8 + $0x200] sm:$0xff]
    %v885 = vld [vmem:[#allocation8 + $0x208] sm:$0xff]
    %v886 = vld [vmem:[#allocation8 + $0x210] sm:$0xff]
    %v887 = vld [vmem:[#allocation8 + $0x218] sm:$0xff]
    %v888 = vld [vmem:[#allocation8 + $0x220] sm:$0xff]
    %v889 = vld [vmem:[#allocation8 + $0x228] sm:$0xff]
    %v890 = vld [vmem:[#allocation8 + $0x230] sm:$0xff]
    %v891 = vld [vmem:[#allocation8 + $0x238] sm:$0xff]
    %v892 = vld [vmem:[#allocation8 + $0x240] sm:$0xff]
    %v893 = vld [vmem:[#allocation8 + $0x248] sm:$0xff]
    %v894 = vld [vmem:[#allocation8 + $0x250] sm:$0xff]
    %v895 = vld [vmem:[#allocation8 + $0x258] sm:$0xff]
    %v896 = vld [vmem:[#allocation8 + $0x260] sm:$0xff]
    %v897 = vld [vmem:[#allocation8 + $0x268] sm:$0xff]
    %v898 = vld [vmem:[#allocation8 + $0x270] sm:$0xff]
    %v899 = vld [vmem:[#allocation8 + $0x278] sm:$0xff]
    %v900 = vld [vmem:[#allocation8 + $0x280] sm:$0xff]
    %v901 = vld [vmem:[#allocation8 + $0x288] sm:$0xff]
    %v902 = vld [vmem:[#allocation8 + $0x290] sm:$0xff]
    %v903 = vld [vmem:[#allocation8 + $0x298] sm:$0xff]
    %v904 = vld [vmem:[#allocation8 + $0x2a0] sm:$0xff]
    %v905 = vld [vmem:[#allocation8 + $0x2a8] sm:$0xff]
    %v906 = vld [vmem:[#allocation8 + $0x2b0] sm:$0xff]
    %v907 = vld [vmem:[#allocation8 + $0x2b8] sm:$0xff]
    %v908 = vld [vmem:[#allocation8 + $0x2c0] sm:$0xff]
    %v909 = vld [vmem:[#allocation8 + $0x2c8] sm:$0xff]
    %v910 = vld [vmem:[#allocation8 + $0x2d0] sm:$0xff]
    %v911 = vld [vmem:[#allocation8 + $0x2d8] sm:$0xff]
    %v912 = vld [vmem:[#allocation8 + $0x2e0] sm:$0xff]
    %v913 = vld [vmem:[#allocation8 + $0x2e8] sm:$0xff]
    %v914 = vld [vmem:[#allocation8 + $0x2f0] sm:$0xff]
    %v915 = vld [vmem:[#allocation8 + $0x2f8] sm:$0xff]
    %v916 = vld [vmem:[#allocation8 + $0x300] sm:$0xff]
    %v917 = vld [vmem:[#allocation8 + $0x308] sm:$0xff]
    %v918 = vld [vmem:[#allocation8 + $0x310] sm:$0xff]
    %v919 = vld [vmem:[#allocation8 + $0x318] sm:$0xff]
    %v920 = vld [vmem:[#allocation8 + $0x320] sm:$0xff]
    %v921 = vld [vmem:[#allocation8 + $0x328] sm:$0xff]
    %v922 = vld [vmem:[#allocation8 + $0x330] sm:$0xff]
    %v923 = vld [vmem:[#allocation8 + $0x338] sm:$0xff]
    %v924 = vld [vmem:[#allocation8 + $0x340] sm:$0xff]
    %v925 = vld [vmem:[#allocation8 + $0x348] sm:$0xff]
    %v926 = vld [vmem:[#allocation8 + $0x350] sm:$0xff]
    %v927 = vld [vmem:[#allocation8 + $0x358] sm:$0xff]
    %v928 = vld [vmem:[#allocation8 + $0x360] sm:$0xff]
    %v929 = vld [vmem:[#allocation8 + $0x368] sm:$0xff]
    %v930 = vld [vmem:[#allocation8 + $0x370] sm:$0xff]
    %v931 = vld [vmem:[#allocation8 + $0x378] sm:$0xff]
    %v932 = vld [vmem:[#allocation8 + $0x380] sm:$0xff]
    %v933 = vld [vmem:[#allocation8 + $0x388] sm:$0xff]
    %v934 = vld [vmem:[#allocation8 + $0x390] sm:$0xff]
    %v935 = vld [vmem:[#allocation8 + $0x398] sm:$0xff]
    %v936 = vld [vmem:[#allocation8 + $0x3a0] sm:$0xff]
    %v937 = vld [vmem:[#allocation8 + $0x3a8] sm:$0xff]
    %v938 = vld [vmem:[#allocation8 + $0x3b0] sm:$0xff]
    %v939 = vld [vmem:[#allocation8 + $0x3b8] sm:$0xff]
    %v940 = vld [vmem:[#allocation8 + $0x3c0] sm:$0xff]
    %v941 = vld [vmem:[#allocation8 + $0x3c8] sm:$0xff]
    %v942 = vld [vmem:[#allocation8 + $0x3d0] sm:$0xff]
    %v943 = vld [vmem:[#allocation8 + $0x3d8] sm:$0xff]
    %v944 = vld [vmem:[#allocation8 + $0x3e0] sm:$0xff]
    %v945 = vld [vmem:[#allocation8 + $0x3e8] sm:$0xff]
    %v946 = vld [vmem:[#allocation8 + $0x3f0] sm:$0xff]
    %v947 = vld [vmem:[#allocation8 + $0x3f8] sm:$0xff]
    %v948 = vld [vmem:[#allocation8 + $0x400] sm:$0xff]
    %v949 = vld [vmem:[#allocation8 + $0x408] sm:$0xff]
    %v950 = vld [vmem:[#allocation8 + $0x410] sm:$0xff]
    %v951 = vld [vmem:[#allocation8 + $0x418] sm:$0xff]
    %v952 = vld [vmem:[#allocation8 + $0x420] sm:$0xff]
    %v953 = vld [vmem:[#allocation8 + $0x428] sm:$0xff]
    %v954 = vld [vmem:[#allocation8 + $0x430] sm:$0xff]
    %v955 = vld [vmem:[#allocation8 + $0x438] sm:$0xff]
    %v956 = vld [vmem:[#allocation8 + $0x440] sm:$0xff]
    %v957 = vld [vmem:[#allocation8 + $0x448] sm:$0xff]
    %v958 = vld [vmem:[#allocation8 + $0x450] sm:$0xff]
    %v959 = vld [vmem:[#allocation8 + $0x458] sm:$0xff]
    %v960 = vld [vmem:[#allocation8 + $0x460] sm:$0xff]
    %v961 = vld [vmem:[#allocation8 + $0x468] sm:$0xff]
    %v962 = vld [vmem:[#allocation8 + $0x470] sm:$0xff]
    %v963 = vld [vmem:[#allocation8 + $0x478] sm:$0xff]
    %v964 = vld [vmem:[#allocation10] sm:$0x7]
    %v966 = vlaneseq
    %v967 = vshrl.u32 %v966, 7
    %v968 = vsub.s32 0, %v967
    %v969 = vrot.slane %v964, %v968
    %v970 = vlaneseq
    %v971 = vshrl.u32 %v970, 7
    %v972 = vsub.s32 1, %v971
    %v973 = vrot.slane %v964, %v972
    %v974 = vlaneseq
    %v975 = vshrl.u32 %v974, 7
    %v976 = vsub.s32 2, %v975
    %v977 = vrot.slane %v964, %v976
    %981 = vmatprep.subr.mxu0 %v866
    %982 = vmatpush1.msra.mxu0 %v865
    %983 = vmatprep.subr.mxu0 %v863
    %984 = vmatpush1.msra.mxu0 %v862
    %985 = vmatprep.subr.mxu0 %v860
    %986 = vmatpush1.msra.mxu0 %v859
    %987 = vmatprep.subr.mxu0 %v857
    %988 = vmatpush1.msra.mxu0 %v856
    %989 = vmatprep.subr.mxu0 %v854
    %990 = vmatpush1.msra.mxu0 %v853
    %991 = vmatprep.subr.mxu0 %v851
    %992 = vmatpush1.msra.mxu0 %v850
    %993 = vmatprep.subr.mxu0 %v848
    %994 = vmatpush1.msra.mxu0 %v847
    %995 = vmatprep.subr.mxu0 %v845
    %996 = vmatpush1.msra.mxu0 %v844
    %997 = vmatprep.subr.mxu0 %v842
    %998 = vmatpush1.msra.mxu0 %v841
    %999 = vmatprep.subr.mxu0 %v839
    %1000 = vmatpush1.msra.mxu0 %v838
    %1001 = vmatprep.subr.mxu0 %v836
    %1002 = vmatpush1.msra.mxu0 %v835
    %1003 = vmatprep.subr.mxu0 %v833
    %1004 = vmatpush1.msra.mxu0 %v832
    %1005 = vmatprep.subr.mxu0 %v830
    %1006 = vmatpush1.msra.mxu0 %v829
    %1007 = vmatprep.subr.mxu0 %v827
    %1008 = vmatpush1.msra.mxu0 %v826
    %1009 = vmatprep.subr.mxu0 %v824
    %1010 = vmatpush1.msra.mxu0 %v823
    %1011 = vmatprep.subr.mxu0 %v821
    %1012 = vmatpush1.msra.mxu0 %v820
    %1013 = vmatprep.subr.mxu0 %v914
    %1014 = vmatpush2.msra.mxu0 %v913
    %1015 = vmatprep.subr.mxu0 %v911
    %1016 = vmatpush2.msra.mxu0 %v910
    %1017 = vmatprep.subr.mxu0 %v908
    %1018 = vmatpush2.msra.mxu0 %v907
    %1019 = vmatprep.subr.mxu0 %v905
    %1020 = vmatpush2.msra.mxu0 %v904
    %1021 = vmatprep.subr.mxu0 %v902
    %1022 = vmatpush2.msra.mxu0 %v901
    %1023 = vmatprep.subr.mxu0 %v899
    %1024 = vmatpush2.msra.mxu0 %v898
    %1025 = vmatprep.subr.mxu0 %v896
    %1026 = vmatpush2.msra.mxu0 %v895
    %1027 = vmatprep.subr.mxu0 %v893
    %1028 = vmatpush2.msra.mxu0 %v892
    %1029 = vmatprep.subr.mxu0 %v890
    %1030 = vmatpush2.msra.mxu0 %v889
    %1031 = vmatprep.subr.mxu0 %v887
    %1032 = vmatpush2.msra.mxu0 %v886
    %1033 = vmatprep.subr.mxu0 %v884
    %1034 = vmatpush2.msra.mxu0 %v883
    %1035 = vmatprep.subr.mxu0 %v881
    %1036 = vmatpush2.msra.mxu0 %v880
    %1037 = vmatprep.subr.mxu0 %v878
    %1038 = vmatpush2.msra.mxu0 %v877
    %1039 = vmatprep.subr.mxu0 %v875
    %1040 = vmatpush2.msra.mxu0 %v874
    %1041 = vmatprep.subr.mxu0 %v872
    %1042 = vmatpush2.msra.mxu0 %v871
    %1043 = vmatprep.subr.mxu0 %v869
    %1044 = vmatpush2.msra.mxu0 %v868
    %1045 = vmatprep.mubr.f32.mxu0 %v608
    %1046 = vmatmul.mubr.f32.gmra.mxu0 %v606
    %v1047 = vpop.f32.mrf.mxu0
    %v1048 = vadd.f32 %v969, %v1047
    %v1049 = vpop.f32.mrf.mxu0
    %v1050 = vadd.f32 %v973, %v1049
    %1051 = vdwg.mxu0
    %1052 = vmatprep.subr.mxu0 %v962
    %1053 = vmatpush1.msra.mxu0 %v961
    %1054 = vmatprep.subr.mxu0 %v959
    %1055 = vmatpush1.msra.mxu0 %v958
    %1056 = vmatprep.subr.mxu0 %v956
    %1057 = vmatpush1.msra.mxu0 %v955
    %1058 = vmatprep.subr.mxu0 %v953
    %1059 = vmatpush1.msra.mxu0 %v952
    %1060 = vmatprep.subr.mxu0 %v950
    %1061 = vmatpush1.msra.mxu0 %v949
    %1062 = vmatprep.subr.mxu0 %v947
    %1063 = vmatpush1.msra.mxu0 %v946
    %1064 = vmatprep.subr.mxu0 %v944
    %1065 = vmatpush1.msra.mxu0 %v943
    %1066 = vmatprep.subr.mxu0 %v941
    %1067 = vmatpush1.msra.mxu0 %v940
    %1068 = vmatprep.subr.mxu0 %v938
    %1069 = vmatpush1.msra.mxu0 %v937
    %1070 = vmatprep.subr.mxu0 %v935
    %1071 = vmatpush1.msra.mxu0 %v934
    %1072 = vmatprep.subr.mxu0 %v932
    %1073 = vmatpush1.msra.mxu0 %v931
    %1074 = vmatprep.subr.mxu0 %v929
    %1075 = vmatpush1.msra.mxu0 %v928
    %1076 = vmatprep.subr.mxu0 %v926
    %1077 = vmatpush1.msra.mxu0 %v925
    %1078 = vmatprep.subr.mxu0 %v923
    %1079 = vmatpush1.msra.mxu0 %v922
    %1080 = vmatprep.subr.mxu0 %v920
    %1081 = vmatpush1.msra.mxu0 %v919
    %1082 = vmatprep.subr.mxu0 %v917
    %1083 = vmatpush1.msra.mxu0 %v916
    %1084 = vmatprep.subr.mxu0 0.0
    %1085 = vmatpush2.msra.mxu0 0.0
    %1086 = vmatprep.subr.mxu0 0.0
    %1087 = vmatpush2.msra.mxu0 0.0
    %1088 = vmatprep.subr.mxu0 0.0
    %1089 = vmatpush2.msra.mxu0 0.0
    %1090 = vmatprep.subr.mxu0 0.0
    %1091 = vmatpush2.msra.mxu0 0.0
    %1092 = vmatprep.subr.mxu0 0.0
    %1093 = vmatpush2.msra.mxu0 0.0
    %1094 = vmatprep.subr.mxu0 0.0
    %1095 = vmatpush2.msra.mxu0 0.0
    %1096 = vmatprep.subr.mxu0 0.0
    %1097 = vmatpush2.msra.mxu0 0.0
    %1098 = vmatprep.subr.mxu0 0.0
    %1099 = vmatpush2.msra.mxu0 0.0
    %1100 = vmatprep.subr.mxu0 0.0
    %1101 = vmatpush2.msra.mxu0 0.0
    %1102 = vmatprep.subr.mxu0 0.0
    %1103 = vmatpush2.msra.mxu0 0.0
    %1104 = vmatprep.subr.mxu0 0.0
    %1105 = vmatpush2.msra.mxu0 0.0
    %1106 = vmatprep.subr.mxu0 0.0
    %1107 = vmatpush2.msra.mxu0 0.0
    %1108 = vmatprep.subr.mxu0 0.0
    %1109 = vmatpush2.msra.mxu0 0.0
    %1110 = vmatprep.subr.mxu0 0.0
    %1111 = vmatpush2.msra.mxu0 0.0
    %1112 = vmatprep.subr.mxu0 0.0
    %1113 = vmatpush2.msra.mxu0 0.0
    %1114 = vmatprep.subr.mxu0 0.0
    %1115 = vmatpush2.msra.mxu0 0.0
    %1116 = vmatprep.mubr.f32.mxu0 0.0
    %1117 = vmatmul.mubr.f32.gmra.mxu0 %v817
    %v1118 = vpop.f32.mrf.mxu0
    %v1119 = vadd.f32 %v1048, %v1118
    %v1120 = vpop.f32.mrf.mxu0
    %v1121 = vadd.f32 %v1050, %v1120
    %1122 = vdwg.mxu0
    %1123 = vmatprep.subr.mxu0 0.0
    %1124 = vmatpush1.msra.mxu0 %v867
    %1125 = vmatprep.subr.mxu0 0.0
    %1126 = vmatpush1.msra.mxu0 %v864
    %1127 = vmatprep.subr.mxu0 0.0
    %1128 = vmatpush1.msra.mxu0 %v861
    %1129 = vmatprep.subr.mxu0 0.0
    %1130 = vmatpush1.msra.mxu0 %v858
    %1131 = vmatprep.subr.mxu0 0.0
    %1132 = vmatpush1.msra.mxu0 %v855
    %1133 = vmatprep.subr.mxu0 0.0
    %1134 = vmatpush1.msra.mxu0 %v852
    %1135 = vmatprep.subr.mxu0 0.0
    %1136 = vmatpush1.msra.mxu0 %v849
    %1137 = vmatprep.subr.mxu0 0.0
    %1138 = vmatpush1.msra.mxu0 %v846
    %1139 = vmatprep.subr.mxu0 0.0
    %1140 = vmatpush1.msra.mxu0 %v843
    %1141 = vmatprep.subr.mxu0 0.0
    %1142 = vmatpush1.msra.mxu0 %v840
    %1143 = vmatprep.subr.mxu0 0.0
    %1144 = vmatpush1.msra.mxu0 %v837
    %1145 = vmatprep.subr.mxu0 0.0
    %1146 = vmatpush1.msra.mxu0 %v834
    %1147 = vmatprep.subr.mxu0 0.0
    %1148 = vmatpush1.msra.mxu0 %v831
    %1149 = vmatprep.subr.mxu0 0.0
    %1150 = vmatpush1.msra.mxu0 %v828
    %1151 = vmatprep.subr.mxu0 0.0
    %1152 = vmatpush1.msra.mxu0 %v825
    %1153 = vmatprep.subr.mxu0 0.0
    %1154 = vmatpush1.msra.mxu0 %v822
    %1155 = vmatprep.subr.mxu0 0.0
    %1156 = vmatpush2.msra.mxu0 %v915
    %1157 = vmatprep.subr.mxu0 0.0
    %1158 = vmatpush2.msra.mxu0 %v912
    %1159 = vmatprep.subr.mxu0 0.0
    %1160 = vmatpush2.msra.mxu0 %v909
    %1161 = vmatprep.subr.mxu0 0.0
    %1162 = vmatpush2.msra.mxu0 %v906
    %1163 = vmatprep.subr.mxu0 0.0
    %1164 = vmatpush2.msra.mxu0 %v903
    %1165 = vmatprep.subr.mxu0 0.0
    %1166 = vmatpush2.msra.mxu0 %v900
    %1167 = vmatprep.subr.mxu0 0.0
    %1168 = vmatpush2.msra.mxu0 %v897
    %1169 = vmatprep.subr.mxu0 0.0
    %1170 = vmatpush2.msra.mxu0 %v894
    %1171 = vmatprep.subr.mxu0 0.0
    %1172 = vmatpush2.msra.mxu0 %v891
    %1173 = vmatprep.subr.mxu0 0.0
    %1174 = vmatpush2.msra.mxu0 %v888
    %1175 = vmatprep.subr.mxu0 0.0
    %1176 = vmatpush2.msra.mxu0 %v885
    %1177 = vmatprep.subr.mxu0 0.0
    %1178 = vmatpush2.msra.mxu0 %v882
    %1179 = vmatprep.subr.mxu0 0.0
    %1180 = vmatpush2.msra.mxu0 %v879
    %1181 = vmatprep.subr.mxu0 0.0
    %1182 = vmatpush2.msra.mxu0 %v876
    %1183 = vmatprep.subr.mxu0 0.0
    %1184 = vmatpush2.msra.mxu0 %v873
    %1185 = vmatprep.subr.mxu0 0.0
    %1186 = vmatpush2.msra.mxu0 %v870
    %1187 = vmatprep.mubr.f32.mxu0 %v608
    %1188 = vmatmul.mubr.f32.gmra.mxu0 %v606
    %v1189 = vpop.f32.mrf.mxu0
    %v1190 = vadd.f32 %v977, %v1189
    %v1191 = vpop.f32.mrf.mxu0
    %1192 = vdwg.mxu0
    %1193 = vmatprep.subr.mxu0 0.0
    %1194 = vmatpush1.msra.mxu0 %v963
    %1195 = vmatprep.subr.mxu0 0.0
    %1196 = vmatpush1.msra.mxu0 %v960
    %1197 = vmatprep.subr.mxu0 0.0
    %1198 = vmatpush1.msra.mxu0 %v957
    %1199 = vmatprep.subr.mxu0 0.0
    %1200 = vmatpush1.msra.mxu0 %v954
    %1201 = vmatprep.subr.mxu0 0.0
    %1202 = vmatpush1.msra.mxu0 %v951
    %1203 = vmatprep.subr.mxu0 0.0
    %1204 = vmatpush1.msra.mxu0 %v948
    %1205 = vmatprep.subr.mxu0 0.0
    %1206 = vmatpush1.msra.mxu0 %v945
    %1207 = vmatprep.subr.mxu0 0.0
    %1208 = vmatpush1.msra.mxu0 %v942
    %1209 = vmatprep.subr.mxu0 0.0
    %1210 = vmatpush1.msra.mxu0 %v939
    %1211 = vmatprep.subr.mxu0 0.0
    %1212 = vmatpush1.msra.mxu0 %v936
    %1213 = vmatprep.subr.mxu0 0.0
    %1214 = vmatpush1.msra.mxu0 %v933
    %1215 = vmatprep.subr.mxu0 0.0
    %1216 = vmatpush1.msra.mxu0 %v930
    %1217 = vmatprep.subr.mxu0 0.0
    %1218 = vmatpush1.msra.mxu0 %v927
    %1219 = vmatprep.subr.mxu0 0.0
    %1220 = vmatpush1.msra.mxu0 %v924
    %1221 = vmatprep.subr.mxu0 0.0
    %1222 = vmatpush1.msra.mxu0 %v921
    %1223 = vmatprep.subr.mxu0 0.0
    %1224 = vmatpush1.msra.mxu0 %v918
    %1225 = vmatprep.subr.mxu0 0.0
    %1226 = vmatpush2.msra.mxu0 0.0
    %1227 = vmatprep.subr.mxu0 0.0
    %1228 = vmatpush2.msra.mxu0 0.0
    %1229 = vmatprep.subr.mxu0 0.0
    %1230 = vmatpush2.msra.mxu0 0.0
    %1231 = vmatprep.subr.mxu0 0.0
    %1232 = vmatpush2.msra.mxu0 0.0
    %1233 = vmatprep.subr.mxu0 0.0
    %1234 = vmatpush2.msra.mxu0 0.0
    %1235 = vmatprep.subr.mxu0 0.0
    %1236 = vmatpush2.msra.mxu0 0.0
    %1237 = vmatprep.subr.mxu0 0.0
    %1238 = vmatpush2.msra.mxu0 0.0
    %1239 = vmatprep.subr.mxu0 0.0
    %1240 = vmatpush2.msra.mxu0 0.0
    %1241 = vmatprep.subr.mxu0 0.0
    %1242 = vmatpush2.msra.mxu0 0.0
    %1243 = vmatprep.subr.mxu0 0.0
    %1244 = vmatpush2.msra.mxu0 0.0
    %1245 = vmatprep.subr.mxu0 0.0
    %1246 = vmatpush2.msra.mxu0 0.0
    %1247 = vmatprep.subr.mxu0 0.0
    %1248 = vmatpush2.msra.mxu0 0.0
    %1249 = vmatprep.subr.mxu0 0.0
    %1250 = vmatpush2.msra.mxu0 0.0
    %1251 = vmatprep.subr.mxu0 0.0
    %1252 = vmatpush2.msra.mxu0 0.0
    %1253 = vmatprep.subr.mxu0 0.0
    %1254 = vmatpush2.msra.mxu0 0.0
    %1255 = vmatprep.subr.mxu0 0.0
    %1256 = vmatpush2.msra.mxu0 0.0
    %1257 = vmatprep.mubr.f32.mxu0 0.0
    %1258 = vmatmul.mubr.f32.gmra.mxu0 %v817
    %v1259 = vpop.f32.mrf.mxu0
    %v1260 = vadd.f32 %v1190, %v1259
    %v1261 = vpop.f32.mrf.mxu0
    %1262 = vdwg.mxu0
    %v1263 = vlaneseq
    %v1264 = vand.u32 %v1263, 127
    %1265 = vmax.xlane.f32.xlu0 %v1119
    %v1266 = vpop.xlane.xlu0 %1265
    %v1267 = vsub.f32 %v1119, %v1266
    %v1268 = vmul.f32 %v1267, 1.442695
    %v1269 = vpow.pop %v1268
    %1270 = vadd.xlane.f32.xlu0 %v1269
    %v1271 = vpop.xlane.xlu0 %1270
    %v1272 = vrcp.pop %v1271
    %v1273 = vmul.f32 %v1269, %v1272
    %1274 = vst [vmem:[#allocation11] sm:$0xff] %v1273
    %vm1275 = vcmp.ge.f32.partialorder %v1119, %v1266
    %v1276 = vsel %vm1275, %v1264, 128
    %v1277 = vand.u32 %v1276, 65535
    %v1278 = vshra.s32 %v1276, 16
    %v1279 = vcvt.s32.f32 %v1277
    %v1280 = vcvt.s32.f32 %v1278
    %1281 = vmin.xlane.f32.xlu0 %v1280
    %v1282 = vpop.xlane.xlu0 %1281
    %vm1283 = vcmp.eq.f32.partialorder %v1280, %v1282
    %v1284 = vsel %vm1283, %v1279, inf
    %1285 = vmin.xlane.f32.xlu0 %v1284
    %v1286 = vpop.xlane.xlu0 %1285
    %v1287 = vcvt.f32.s32 %v1286
    %v1288 = vcvt.f32.s32 %v1282
    %v1289 = vshll.u32 %v1288, 16
    %v1290 = vadd.s32 %v1289, %v1287
    %vm1291 = vcmp.eq.s32.totalorder %v1264, 0
    %v1292 = vsel %vm1291, %v1290, 0
    %1293 = vmax.xlane.f32.xlu0 %v1121
    %v1294 = vpop.xlane.xlu0 %1293
    %v1295 = vsub.f32 %v1121, %v1294
    %v1296 = vmul.f32 %v1295, 1.442695
    %v1297 = vpow.pop %v1296
    %1298 = vadd.xlane.f32.xlu0 %v1297
    %v1299 = vpop.xlane.xlu0 %1298
    %v1300 = vrcp.pop %v1299
    %v1301 = vmul.f32 %v1297, %v1300
    %1302 = vst [vmem:[#allocation11 + $0x8] sm:$0xff] %v1301
    %vm1303 = vcmp.ge.f32.partialorder %v1121, %v1294
    %v1304 = vsel %vm1303, %v1264, 128
    %v1305 = vand.u32 %v1304, 65535
    %v1306 = vshra.s32 %v1304, 16
    %v1307 = vcvt.s32.f32 %v1305
    %v1308 = vcvt.s32.f32 %v1306
    %1309 = vmin.xlane.f32.xlu0 %v1308
    %v1310 = vpop.xlane.xlu0 %1309
    %vm1311 = vcmp.eq.f32.partialorder %v1308, %v1310
    %v1312 = vsel %vm1311, %v1307, inf
    %1313 = vmin.xlane.f32.xlu0 %v1312
    %v1314 = vpop.xlane.xlu0 %1313
    %v1315 = vcvt.f32.s32 %v1314
    %v1316 = vcvt.f32.s32 %v1310
    %v1317 = vshll.u32 %v1316, 16
    %v1318 = vadd.s32 %v1317, %v1315
    %vm1319 = vcmp.eq.s32.totalorder %v1264, 1
    %v1320 = vsel %vm1319, %v1318, %v1292
    %1321 = vmax.xlane.f32.xlu0 %v1260
    %v1322 = vpop.xlane.xlu0 %1321
    %v1323 = vsub.f32 %v1260, %v1322
    %v1324 = vmul.f32 %v1323, 1.442695
    %v1325 = vpow.pop %v1324
    %1326 = vadd.xlane.f32.xlu0 %v1325
    %v1327 = vpop.xlane.xlu0 %1326
    %v1328 = vrcp.pop %v1327
    %v1329 = vmul.f32 %v1325, %v1328
    %1330 = vst [vmem:[#allocation11 + $0x10] sm:$0xff] %v1329
    %vm1331 = vcmp.ge.f32.partialorder %v1260, %v1322
    %v1332 = vsel %vm1331, %v1264, 128
    %v1333 = vand.u32 %v1332, 65535
    %v1334 = vshra.s32 %v1332, 16
    %v1335 = vcvt.s32.f32 %v1333
    %v1336 = vcvt.s32.f32 %v1334
    %1337 = vmin.xlane.f32.xlu0 %v1336
    %v1338 = vpop.xlane.xlu0 %1337
    %vm1339 = vcmp.eq.f32.partialorder %v1336, %v1338
    %v1340 = vsel %vm1339, %v1335, inf
    %1341 = vmin.xlane.f32.xlu0 %v1340
    %v1342 = vpop.xlane.xlu0 %1341
    %v1343 = vcvt.f32.s32 %v1342
    %v1344 = vcvt.f32.s32 %v1338
    %v1345 = vshll.u32 %v1344, 16
    %v1346 = vadd.s32 %v1345, %v1343
    %vm1347 = vcmp.eq.s32.totalorder %v1264, 2
    %v1348 = vsel %vm1347, %v1346, %v1320
    %1349 = vst [vmem:[#allocation12] sm:$0xff] %v1348
    // Predicated region
    $region42: #{tpu_custom_call.1} parent=1 // pred_check
      _
    $region43: #{tpu_custom_call.1} parent=1 // pred_check_branch
      %1351 = sbr.rel (0) target = $region45
    $region44: #{tpu_custom_call.1} parent=1 // pred_region
      %s1353 = ssub.s32 384, 384
      %1354 = vsyncadd [#allocation4], %s1353
      %s1356 = sshll.u32 [#allocation11], 4
      %s1357 = int_to_ptr.vmem [resolvable:$true] %s1356
      %1359 = dma.vmem_to_hbm [thread:$0]  %s1357, 384, %s5, [#allocation4]
    $region45: #{tpu_custom_call.1} parent=1 // pred_fallthru
      _
    // Predicated region
    $region46: #{tpu_custom_call.1} parent=1 // pred_check
      _
    $region47: #{tpu_custom_call.1} parent=1 // pred_check_branch
      %1361 = sbr.rel (0) target = $region49
    $region48: #{tpu_custom_call.1} parent=1 // pred_region
      %s1363 = ssub.s32 128, 128
      %1364 = vsyncadd [#allocation13], %s1363
      %s1366 = sshll.u32 [#allocation12], 4
      %s1367 = int_to_ptr.vmem [resolvable:$true] %s1366
      %1369 = dma.vmem_to_hbm [thread:$0]  %s1367, 128, %s6, [#allocation13]
    $region49: #{tpu_custom_call.1} parent=1 // pred_fallthru
      _
    // Predicated region
    $region50: #{tpu_custom_call.1} parent=1 // pred_check
      _
    $region51: #{tpu_custom_call.1} parent=1 // pred_check_branch
      %1371 = sbr.rel (0) target = $region53
    $region52: #{tpu_custom_call.1} parent=1 // pred_region
      %1372 = dma.done [#allocation4], 384
    $region53: #{tpu_custom_call.1} parent=1 // pred_fallthru
      _
    // Predicated region
    $region54: #{tpu_custom_call.1} parent=1 // pred_check
      _
    $region55: #{tpu_custom_call.1} parent=1 // pred_check_branch
      %1374 = sbr.rel (0) target = $region57
    $region56: #{tpu_custom_call.1} parent=1 // pred_region
      %1375 = dma.done [#allocation13], 128
    $region57: #{tpu_custom_call.1} parent=1 // pred_fallthru
      _
    %1376 = vsyncpa [#allocation3], 1
    %1377 = vsyncpa [#allocation6], 1
    %1378 = vsyncpa [#allocation9], 1
    %1379 = vsyncpa [#allocation4], 1
    %1380 = vsyncpa [#allocation13], 1

</llo_original>
